<compile_context>
chip_gen: v7x
topology: tpu7x:2x2x1
jax: 0.10.0
libtpu: 0.0.40
codegen_flags: <defaults>
</compile_context>

<pallas_src>
import functools

import jax
import jax.numpy as jnp
from jax.experimental import pallas as pl
from jax.experimental.pallas import tpu as pltpu


# --------------------------------------------------------------------------- #
# Kernel
# --------------------------------------------------------------------------- #
def _sca_kernel(k_ref, q_ref, v_ref, w_ref, g_ref, o_ref, *, embed):
    """One row tile: k/q/v_ref are [block_n, E]; w_ref is [E, 3E] =
    [Wk_sum | Wq_scaled | Wv_sum] (all pre-transposed to [in, out]); g_ref is
    the [E, E] per-head block-diagonal ones matrix; o_ref is [block_n, E]."""
    # Static slices at multiples of 128 lanes are free.
    k_sum = jnp.dot(k_ref[...], w_ref[:, 0:embed],
                    preferred_element_type=jnp.float32)
    q_proj = jnp.dot(q_ref[...], w_ref[:, embed:2 * embed],
                     preferred_element_type=jnp.float32)
    # Wq was pre-scaled by 1/(sqrt(D)*sqrt(E)); k_sum already carries the sum
    # over heads (folded into the weight), so this is directly the logit matrix.
    logits = q_proj * k_sum

    # Per-head softmax over the D lanes of each head.  The row max is constant
    # within every head group, so subtracting the global row max is exact.
    # TODO(synk): a per-head max would avoid whole-head exp underflow if heads
    # ever had wildly different logit scales; not a concern at these magnitudes.
    row_max = jnp.max(logits, axis=-1, keepdims=True)
    e = jnp.exp(logits - row_max)
    # Per-head denominator broadcast via the block-diagonal ones matrix G (MXU);
    # kept in f32 for denominator accuracy.  Normalization uses the EUP
    # approximate reciprocal (its own VLIW slot, effectively free).
    denom = jnp.dot(e, g_ref[...], preferred_element_type=jnp.float32)
    attn = e * pl.reciprocal(denom, approx=True)

    # V path last: shortest live range for its f32 intermediate.
    v_sum = jnp.dot(v_ref[...], w_ref[:, 2 * embed:3 * embed],
                    preferred_element_type=jnp.float32)
    o_ref[...] = (attn * v_sum).astype(o_ref.dtype)


# --------------------------------------------------------------------------- #
# Tiling / VMEM heuristics
# --------------------------------------------------------------------------- #
def _tpu_vmem_capacity_bytes():
    try:
        info = pltpu.get_tpu_info()
        cap = getattr(info, "vmem_capacity_bytes", None)
        if cap:
            return int(cap)
    except Exception:
        pass
    return 64 * 1024 * 1024  # conservative: v7x per-TC physical VMEM


def _vmem_limit_bytes():
    cap = _tpu_vmem_capacity_bytes()
    # 48 MiB on v7x (64 MiB physical), 96 MiB on v5e/v6e (128 MiB physical).
    return int(min(cap * 3 // 4, 112 * 1024 * 1024))


def _default_block_n(n_rows, embed, in_itemsize, out_itemsize, const_bytes,
                     vmem_limit):
    """Largest row tile that fits the VMEM budget; only trade tile size for
    pipeline depth (>= 4 grid steps, preferring even grid lengths for the v7x
    megacore) when each step still moves >= ~512 KiB per row operand."""
    # Charge the (double-buffered) constant operands and some Mosaic headroom.
    budget = max(vmem_limit - 2 * const_bytes - (6 << 20), 2 << 20)
    # Per row: double-buffered k/q/v input tiles + double-buffered output tile
    # + ~7 live f32 [block_n, E] intermediates inside the kernel body.
    per_row = (2 * 3 * in_itemsize + 2 * out_itemsize + 7 * 4) * embed
    cap_rows = max(8, int(budget // per_row))

    step = 16 if min(in_itemsize, out_itemsize) < 4 else 8  # sublane packing
    divs = {d for d in range(step, min(n_rows, cap_rows) + 1, step)
            if n_rows % d == 0}
    if n_rows <= cap_rows:
        divs.add(n_rows)
    if not divs:
        # TODO(synk): pad n_rows to a VMEM-friendly multiple instead of one tile.
        return n_rows
    divs = sorted(divs)
    largest = divs[-1]

    min_rows_big_dma = max(1, (512 * 1024) // (embed * in_itemsize))
    deep = [d for d in divs if n_rows // d >= 4 and d >= min_rows_big_dma]
    if deep:
        even = [d for d in deep if (n_rows // d) % 2 == 0]
        return max(even) if even else max(deep)
    return largest


# --------------------------------------------------------------------------- #
# Wrapper
# --------------------------------------------------------------------------- #
def spatial_cross_attention(value, key, query, wv, wk, wq, heads, *,
                            block_n=None, compute_dtype=None, out_dtype=None):
    """value/key/query: [N, E]; wv/wk/wq: [E, E] nn.Linear weights ([out, in]).

    compute_dtype=jnp.bfloat16 casts the matmul operands (and, by default, the
    output) to bf16 while keeping f32 accumulation and f32 softmax math inside
    the kernel — the recommended production setting on all TPU generations."""
    n_rows, embed = query.shape
    assert value.shape == (n_rows, embed) and key.shape == (n_rows, embed)
    assert embed % heads == 0, "Embed size needs to be divisible by heads"
    head_dim = embed // heads
    if out_dtype is None:
        out_dtype = compute_dtype if compute_dtype is not None else query.dtype

    # ---- One-time weight prep (wrapper-side, negligible vs. the row streams) --
    # Fold both softmax pre-scales (1/sqrt(D) and 1/sqrt(E)) into Wq, fold the
    # head-sum over K / V into their weights, and pre-transpose everything to
    # [in, out] so the kernel uses the MXU-native contraction.
    inv_scale = 1.0 / (float(head_dim) ** 0.5 * float(embed) ** 0.5)

    def head_summed(w):                                   # w: [out, in]
        ws = jnp.sum(w.T.reshape(embed, heads, head_dim), axis=1)   # [in, D]
        return jnp.tile(ws, (1, heads))                              # [in, E]

    w_all = jnp.concatenate(
        [head_summed(wk), wq.T * inv_scale, head_summed(wv)], axis=1)  # [E, 3E]

    # Per-head group (block-diagonal ones) matrix for the softmax denominator.
    h_idx = jnp.arange(embed) // head_dim
    g_mat = (h_idx[:, None] == h_idx[None, :]).astype(jnp.float32)

    if compute_dtype is not None:
        key, query, value = (x.astype(compute_dtype) for x in (key, query, value))
        w_all = w_all.astype(compute_dtype)

    # ---- Tiling ---------------------------------------------------------------
    in_itemsize = jnp.dtype(key.dtype).itemsize
    out_itemsize = jnp.dtype(out_dtype).itemsize
    vmem_limit = _vmem_limit_bytes()
    const_bytes = (embed * 3 * embed) * in_itemsize + (embed * embed) * 4
    if block_n is None:
        block_n = _default_block_n(n_rows, embed, in_itemsize, out_itemsize,
                                   const_bytes, vmem_limit)
    assert n_rows % block_n == 0, (n_rows, block_n)
    grid = (n_rows // block_n,)

    row_spec = pl.BlockSpec((block_n, embed), lambda i: (i, 0))
    const_w_spec = pl.BlockSpec((embed, 3 * embed), lambda i: (0, 0))
    const_g_spec = pl.BlockSpec((embed, embed), lambda i: (0, 0))

    kernel = functools.partial(_sca_kernel, embed=embed)
    return pl.pallas_call(
        kernel,
        out_shape=jax.ShapeDtypeStruct((n_rows, embed), out_dtype),
        grid=grid,
        in_specs=[row_spec, row_spec, row_spec, const_w_spec, const_g_spec],
        out_specs=row_spec,
        compiler_params=pltpu.CompilerParams(
            dimension_semantics=("parallel",),
            vmem_limit_bytes=vmem_limit),
    )(key, query, value, w_all, g_mat)


# --------------------------------------------------------------------------- #
# Pure-JAX reference (replica of the PyTorch forward)
# --------------------------------------------------------------------------- #
def reference(value, key, query, wv, wk, wq, heads):
    n_rows, embed = query.shape
    head_dim = embed // heads
    v = (value @ wv.T).reshape(n_rows, heads, head_dim)
    k = (key @ wk.T).reshape(n_rows, heads, head_dim)
    q = (query @ wq.T).reshape(n_rows, heads, head_dim)
    attn = q * jnp.sum(k, axis=1, keepdims=True) / jnp.float32(head_dim) ** 0.5
    attn = jax.nn.softmax(attn / jnp.float32(embed) ** 0.5, axis=-1)
    out = attn * jnp.sum(v, axis=1, keepdims=True)
    return out.reshape(n_rows, embed)


if __name__ == "__main__":
    # rows, embed_size, heads  ->  head_dim = 32; E is a multiple of 128 so the
    # output stores are lane-dense.
    n_rows, embed, heads = 256, 128, 4

    root = jax.random.PRNGKey(0)
    kv, kk, kq, kwv, kwk, kwq = jax.random.split(root, 6)

    value = jax.random.normal(kv, (n_rows, embed), dtype=jnp.float32)
    key_t = jax.random.normal(kk, (n_rows, embed), dtype=jnp.float32)
    query = jax.random.normal(kq, (n_rows, embed), dtype=jnp.float32)

    # Deterministic "nn.Linear(E, E, bias=False)" weights, shape (E, E) = [out, in].
    w_scale = 1.0 / embed ** 0.5
    wv = jax.random.normal(kwv, (embed, embed), dtype=jnp.float32) * w_scale
    wk = jax.random.normal(kwk, (embed, embed), dtype=jnp.float32) * w_scale
    wq = jax.random.normal(kwq, (embed, embed), dtype=jnp.float32) * w_scale

    ref = reference(value, key_t, query, wv, wk, wq, heads)

    # f32 path — tight check (only the EUP approx-reciprocal deviates from ref).
    out = jax.block_until_ready(
        spatial_cross_attention(value, key_t, query, wv, wk, wq, heads))
    assert out.shape == (n_rows, embed) and out.dtype == jnp.float32
    err = jnp.max(jnp.abs(out - ref))
    assert jnp.allclose(out, ref, atol=5e-3, rtol=5e-3), f"f32 max abs err {err}"

    # Production path — bf16 matmul operands + bf16 output, f32 accumulation.
    out_bf16 = jax.block_until_ready(
        spatial_cross_attention(value, key_t, query, wv, wk, wq, heads,
                                compute_dtype=jnp.bfloat16))
    assert out_bf16.shape == (n_rows, embed) and out_bf16.dtype == jnp.bfloat16
    err_bf16 = jnp.max(jnp.abs(out_bf16.astype(jnp.float32) - ref))
    assert jnp.allclose(out_bf16.astype(jnp.float32), ref,
                        atol=3e-2, rtol=3e-2), f"bf16 max abs err {err_bf16}"

    print("KERNEL_OK")
</pallas_src>

<mosaic_0001>
module attributes {stable_mosaic.version = 11 : i64} {
  func.func @_sca_kernel(%arg0: i32, %arg1: memref<256x128xf32, #tpu.memory_space<vmem>>, %arg2: memref<256x128xf32, #tpu.memory_space<vmem>>, %arg3: memref<256x128xf32, #tpu.memory_space<vmem>>, %arg4: memref<128x384xf32, #tpu.memory_space<vmem>>, %arg5: memref<128x128xf32, #tpu.memory_space<vmem>>, %arg6: memref<256x128xf32, #tpu.memory_space<vmem>>) attributes {dimension_semantics = [#tpu.dimension_semantics<parallel>], iteration_bounds = array<i64: 1>, scalar_prefetch = 0 : i64, scratch_operands = 0 : i64, tpu.core_type = #tpu.core_type<tc>, window_params = [{transform_indices = @transform_0, window_bounds = array<i64: 256, 128>}, {transform_indices = @transform_1, window_bounds = array<i64: 256, 128>}, {transform_indices = @transform_2, window_bounds = array<i64: 256, 128>}, {pipeline_mode = #tpu.pipeline_mode<synchronous>, transform_indices = @transform_3, window_bounds = array<i64: 128, 384>}, {pipeline_mode = #tpu.pipeline_mode<synchronous>, transform_indices = @transform_4, window_bounds = array<i64: 128, 128>}, {transform_indices = @transform_5, window_bounds = array<i64: 256, 128>}]} {
    %c0 = arith.constant 0 : index
    %c0_0 = arith.constant 0 : index
    %0 = vector.load %arg1[%c0, %c0_0] : memref<256x128xf32, #tpu.memory_space<vmem>>, vector<256x128xf32>
    %c0_1 = arith.constant 0 : index
    %c0_2 = arith.constant 0 : index
    %1 = vector.load %arg4[%c0_1, %c0_2] : memref<128x384xf32, #tpu.memory_space<vmem>>, vector<128x128xf32>
    %cst = arith.constant dense<0.000000e+00> : vector<256x128xf32>
    %2 = tpu.matmul %0, %1, %cst {dimension_numbers = #tpu.dot_dimension_numbers<[1], [0], [0], [1], [0, 0, 1, 1], [], []>} : vector<256x128xf32>, vector<128x128xf32>, vector<256x128xf32> -> vector<256x128xf32>
    %c0_3 = arith.constant 0 : index
    %c0_4 = arith.constant 0 : index
    %3 = vector.load %arg2[%c0_3, %c0_4] : memref<256x128xf32, #tpu.memory_space<vmem>>, vector<256x128xf32>
    %c0_5 = arith.constant 0 : index
    %c128 = arith.constant 128 : index
    %4 = vector.load %arg4[%c0_5, %c128] : memref<128x384xf32, #tpu.memory_space<vmem>>, vector<128x128xf32>
    %cst_6 = arith.constant dense<0.000000e+00> : vector<256x128xf32>
    %5 = tpu.matmul %3, %4, %cst_6 {dimension_numbers = #tpu.dot_dimension_numbers<[1], [0], [0], [1], [0, 0, 1, 1], [], []>} : vector<256x128xf32>, vector<128x128xf32>, vector<256x128xf32> -> vector<256x128xf32>
    %6 = arith.mulf %5, %2 : vector<256x128xf32>
    %cst_7 = arith.constant dense<0xFF800000> : vector<256xf32>
    %7 = vector.multi_reduction <maximumf>, %6, %cst_7 [1] : vector<256x128xf32> to vector<256xf32>
    %8 = vector.shape_cast %7 : vector<256xf32> to vector<256x1xf32>
    %9 = vector.broadcast %8 : vector<256x1xf32> to vector<256x128xf32>
    %10 = arith.subf %6, %9 : vector<256x128xf32>
    %11 = math.exp %10 : vector<256x128xf32>
    %c0_8 = arith.constant 0 : index
    %c0_9 = arith.constant 0 : index
    %12 = vector.load %arg5[%c0_8, %c0_9] : memref<128x128xf32, #tpu.memory_space<vmem>>, vector<128x128xf32>
    %cst_10 = arith.constant dense<0.000000e+00> : vector<256x128xf32>
    %13 = tpu.matmul %11, %12, %cst_10 {dimension_numbers = #tpu.dot_dimension_numbers<[1], [0], [0], [1], [0, 0, 1, 1], [], []>} : vector<256x128xf32>, vector<128x128xf32>, vector<256x128xf32> -> vector<256x128xf32>
    %14 = tpu.reciprocal %13 {approx = true} : vector<256x128xf32> -> vector<256x128xf32>
    %15 = arith.mulf %11, %14 : vector<256x128xf32>
    %c0_11 = arith.constant 0 : index
    %c0_12 = arith.constant 0 : index
    %16 = vector.load %arg3[%c0_11, %c0_12] : memref<256x128xf32, #tpu.memory_space<vmem>>, vector<256x128xf32>
    %c0_13 = arith.constant 0 : index
    %c256 = arith.constant 256 : index
    %17 = vector.load %arg4[%c0_13, %c256] : memref<128x384xf32, #tpu.memory_space<vmem>>, vector<128x128xf32>
    %cst_14 = arith.constant dense<0.000000e+00> : vector<256x128xf32>
    %18 = tpu.matmul %16, %17, %cst_14 {dimension_numbers = #tpu.dot_dimension_numbers<[1], [0], [0], [1], [0, 0, 1, 1], [], []>} : vector<256x128xf32>, vector<128x128xf32>, vector<256x128xf32> -> vector<256x128xf32>
    %19 = arith.mulf %15, %18 : vector<256x128xf32>
    %c0_15 = arith.constant 0 : index
    %c0_16 = arith.constant 0 : index
    %20 = vector.load %arg6[%c0_15, %c0_16] : memref<256x128xf32, #tpu.memory_space<vmem>>, vector<256x128xf32>
    tpu.vector_store %arg6[%c0_15, %c0_16], %19 {strides = array<i32>} : memref<256x128xf32, #tpu.memory_space<vmem>>, vector<256x128xf32>,
    return
  }
  func.func @transform_0(%arg0: i32) -> (i32, i32) {
    %c0_i32 = arith.constant 0 : i32
    %c0_i32_0 = arith.constant 0 : i32
    return %arg0, %c0_i32 : i32, i32
  }
  func.func @transform_1(%arg0: i32) -> (i32, i32) {
    %c0_i32 = arith.constant 0 : i32
    %c0_i32_0 = arith.constant 0 : i32
    return %arg0, %c0_i32 : i32, i32
  }
  func.func @transform_2(%arg0: i32) -> (i32, i32) {
    %c0_i32 = arith.constant 0 : i32
    %c0_i32_0 = arith.constant 0 : i32
    return %arg0, %c0_i32 : i32, i32
  }
  func.func @transform_3(%arg0: i32) -> (i32, i32) {
    %c0_i32 = arith.constant 0 : i32
    %c0_i32_0 = arith.constant 0 : i32
    %c0_i32_1 = arith.constant 0 : i32
    return %c0_i32, %c0_i32_0 : i32, i32
  }
  func.func @transform_4(%arg0: i32) -> (i32, i32) {
    %c0_i32 = arith.constant 0 : i32
    %c0_i32_0 = arith.constant 0 : i32
    %c0_i32_1 = arith.constant 0 : i32
    return %c0_i32, %c0_i32_0 : i32, i32
  }
  func.func @transform_5(%arg0: i32) -> (i32, i32) {
    %c0_i32 = arith.constant 0 : i32
    %c0_i32_0 = arith.constant 0 : i32
    return %arg0, %c0_i32 : i32, i32
  }
}

</mosaic_0001>

<llo_original>
// kernel: tpu_custom_call.1
$region0: #{tpu_custom_call.1}
  #allocation0 [shape = 'u32[]', space=smem, size = 0x4, offset = 0x4, fixed_abs, tag = 'smem constant byte address 0x4 - core index']
  #allocation1 [shape = 'u32[144,128]{1,0:T(1,128)}', space=vmem, size = 0x12000, scoped, tag = 'internal scratch']
  %s0 = inlined_call_operand.hbm [shape: f32[256,128], index: 0, kind: input, shape index: {}]
  %s1 = inlined_call_operand.hbm [shape: f32[256,128], index: 1, kind: input, shape index: {}]
  %s2 = inlined_call_operand.hbm [shape: f32[256,128], index: 2, kind: input, shape index: {}]
  %s3 = inlined_call_operand.hbm [shape: f32[128,384], index: 3, kind: input, shape index: {}]
  %s4 = inlined_call_operand.hbm [shape: f32[128,128], index: 4, kind: input, shape index: {}]
  %s5 = inlined_call_operand.hbm [shape: f32[256,128], index: 5, kind: output, shape index: {}]
  %s6 = sld [smem:[#allocation0]]
  $region50: #{tpu_custom_call.1} parent=0
    _
  %s8 = ssub.s32 1, %s6
  %s9 = scalar_select 0, %s8, %s6
  $region1: #{tpu_custom_call.1} parent=0
    #allocation2 [shape = 'u8[131072]{0}', space=vmem, size = 0x20000, scoped, tag = 'input window, operand 0, single buffered']
    #allocation3 [shape = 's32[1]{0}', space=sflag, size = 0x4, scoped, tag = 'scoped memory for tpu_custom_call.1']
    #allocation4 [shape = 's32[1]{0}', space=sflag, size = 0x4, scoped, tag = 'scoped memory for tpu_custom_call.1']
    #allocation5 [shape = 'u8[131072]{0}', space=vmem, size = 0x20000, scoped, tag = 'input window, operand 1, single buffered']
    #allocation6 [shape = 's32[1]{0}', space=sflag, size = 0x4, scoped, tag = 'scoped memory for tpu_custom_call.1']
    #allocation7 [shape = 'u8[131072]{0}', space=vmem, size = 0x20000, scoped, tag = 'input window, operand 2, single buffered']
    #allocation8 [shape = 'u8[196608]{0}', space=vmem, size = 0x30000, scoped, tag = 'input window, operand 3, single buffered']
    #allocation9 [shape = 's32[1]{0}', space=sflag, size = 0x4, scoped, tag = 'scoped memory for tpu_custom_call.1']
    #allocation10 [shape = 'u8[65536]{0}', space=vmem, size = 0x10000, scoped, tag = 'input window, operand 4, single buffered']
    #allocation11 [shape = 'u8[131072]{0}', space=vmem, size = 0x20000, scoped, tag = 'output window, operand 0, single buffered']
    %10 = vsyncpa [#allocation3], 0
    %11 = vsyncpa [#allocation6], 0
    %12 = vsyncpa [#allocation9], 0
    %13 = vsyncpa [#allocation4], 0
    // Predicated region
    $region2: #{tpu_custom_call.1} parent=1 // pred_check
      _
    $region3: #{tpu_custom_call.1} parent=1 // pred_check_branch
      %15 = sbr.rel (0) target = $region5
    $region4: #{tpu_custom_call.1} parent=1 // pred_region
      %s17 = ssub.s32 4096, 4096
      %18 = vsyncadd [#allocation3], %s17
      %s19 = sshll.u32 [#allocation2], 4
      %s20 = int_to_ptr.vmem [resolvable:$true] %s19
      %25 = dma.hbm_to_vmem [thread:$0]  %s0, 4096, %s20, [#allocation3], 128, 128, 8
    $region5: #{tpu_custom_call.1} parent=1 // pred_fallthru
      _
    // Predicated region
    $region6: #{tpu_custom_call.1} parent=1 // pred_check
      _
    $region7: #{tpu_custom_call.1} parent=1 // pred_check_branch
      %27 = sbr.rel (0) target = $region9
    $region8: #{tpu_custom_call.1} parent=1 // pred_region
      %s29 = ssub.s32 4096, 4096
      %30 = vsyncadd [#allocation6], %s29
      %s31 = sshll.u32 [#allocation5], 4
      %s32 = int_to_ptr.vmem [resolvable:$true] %s31
      %37 = dma.hbm_to_vmem [thread:$0]  %s1, 4096, %s32, [#allocation6], 128, 128, 8
    $region9: #{tpu_custom_call.1} parent=1 // pred_fallthru
      _
    // Predicated region
    $region10: #{tpu_custom_call.1} parent=1 // pred_check
      _
    $region11: #{tpu_custom_call.1} parent=1 // pred_check_branch
      %39 = sbr.rel (0) target = $region13
    $region12: #{tpu_custom_call.1} parent=1 // pred_region
      %s41 = ssub.s32 4096, 4096
      %42 = vsyncadd [#allocation6], %s41
      %s43 = sshll.u32 [#allocation7], 4
      %s44 = int_to_ptr.vmem [resolvable:$true] %s43
      %49 = dma.hbm_to_vmem [thread:$0]  %s2, 4096, %s44, [#allocation6], 128, 128, 8
    $region13: #{tpu_custom_call.1} parent=1 // pred_fallthru
      _
    // Predicated region
    $region14: #{tpu_custom_call.1} parent=1 // pred_check
      _
    $region15: #{tpu_custom_call.1} parent=1 // pred_check_branch
      %51 = sbr.rel (0) target = $region17
    $region16: #{tpu_custom_call.1} parent=1 // pred_region
      %s53 = ssub.s32 6144, 6144
      %54 = vsyncadd [#allocation9], %s53
      %s55 = sshll.u32 [#allocation8], 4
      %s56 = int_to_ptr.vmem [resolvable:$true] %s55
      %61 = dma.hbm_to_vmem [thread:$0]  %s3, 6144, %s56, [#allocation9], 384, 384, 24
    $region17: #{tpu_custom_call.1} parent=1 // pred_fallthru
      _
    // Predicated region
    $region18: #{tpu_custom_call.1} parent=1 // pred_check
      _
    $region19: #{tpu_custom_call.1} parent=1 // pred_check_branch
      %63 = sbr.rel (0) target = $region21
    $region20: #{tpu_custom_call.1} parent=1 // pred_region
      %s65 = ssub.s32 2048, 2048
      %66 = vsyncadd [#allocation9], %s65
      %s67 = sshll.u32 [#allocation10], 4
      %s68 = int_to_ptr.vmem [resolvable:$true] %s67
      %73 = dma.hbm_to_vmem [thread:$0]  %s4, 2048, %s68, [#allocation9], 128, 128, 8
    $region21: #{tpu_custom_call.1} parent=1 // pred_fallthru
      _
    // Predicated region
    $region22: #{tpu_custom_call.1} parent=1 // pred_check
      _
    $region23: #{tpu_custom_call.1} parent=1 // pred_check_branch
      %75 = sbr.rel (0) target = $region25
    $region24: #{tpu_custom_call.1} parent=1 // pred_region
      %76 = dma.done [#allocation3], 4096
    $region25: #{tpu_custom_call.1} parent=1 // pred_fallthru
      _
    // Predicated region
    $region26: #{tpu_custom_call.1} parent=1 // pred_check
      _
    $region27: #{tpu_custom_call.1} parent=1 // pred_check_branch
      %78 = sbr.rel (0) target = $region29
    $region28: #{tpu_custom_call.1} parent=1 // pred_region
      %79 = dma.done [#allocation6], 4096
    $region29: #{tpu_custom_call.1} parent=1 // pred_fallthru
      _
    // Predicated region
    $region30: #{tpu_custom_call.1} parent=1 // pred_check
      _
    $region31: #{tpu_custom_call.1} parent=1 // pred_check_branch
      %81 = sbr.rel (0) target = $region33
    $region32: #{tpu_custom_call.1} parent=1 // pred_region
      %82 = dma.done [#allocation6], 4096
    $region33: #{tpu_custom_call.1} parent=1 // pred_fallthru
      _
    // Predicated region
    $region34: #{tpu_custom_call.1} parent=1 // pred_check
      _
    $region35: #{tpu_custom_call.1} parent=1 // pred_check_branch
      %84 = sbr.rel (0) target = $region37
    $region36: #{tpu_custom_call.1} parent=1 // pred_region
      %85 = dma.done [#allocation9], 6144
    $region37: #{tpu_custom_call.1} parent=1 // pred_fallthru
      _
    // Predicated region
    $region38: #{tpu_custom_call.1} parent=1 // pred_check
      _
    $region39: #{tpu_custom_call.1} parent=1 // pred_check_branch
      %87 = sbr.rel (0) target = $region41
    $region40: #{tpu_custom_call.1} parent=1 // pred_region
      %88 = dma.done [#allocation9], 2048
    $region41: #{tpu_custom_call.1} parent=1 // pred_fallthru
      _
    %v89 = vld [vmem:[#allocation2] sm:$0xff]
    %v90 = vld [vmem:[#allocation2 + $0x8] sm:$0xff]
    %v91 = vld [vmem:[#allocation2 + $0x10] sm:$0xff]
    %v92 = vld [vmem:[#allocation2 + $0x18] sm:$0xff]
    %v93 = vld [vmem:[#allocation2 + $0x20] sm:$0xff]
    %v94 = vld [vmem:[#allocation2 + $0x28] sm:$0xff]
    %v95 = vld [vmem:[#allocation2 + $0x30] sm:$0xff]
    %v96 = vld [vmem:[#allocation2 + $0x38] sm:$0xff]
    %v97 = vld [vmem:[#allocation2 + $0x40] sm:$0xff]
    %v98 = vld [vmem:[#allocation2 + $0x48] sm:$0xff]
    %v99 = vld [vmem:[#allocation2 + $0x50] sm:$0xff]
    %v100 = vld [vmem:[#allocation2 + $0x58] sm:$0xff]
    %v101 = vld [vmem:[#allocation2 + $0x60] sm:$0xff]
    %v102 = vld [vmem:[#allocation2 + $0x68] sm:$0xff]
    %v103 = vld [vmem:[#allocation2 + $0x70] sm:$0xff]
    %v104 = vld [vmem:[#allocation2 + $0x78] sm:$0xff]
    %v105 = vld [vmem:[#allocation2 + $0x80] sm:$0xff]
    %v106 = vld [vmem:[#allocation2 + $0x88] sm:$0xff]
    %v107 = vld [vmem:[#allocation2 + $0x90] sm:$0xff]
    %v108 = vld [vmem:[#allocation2 + $0x98] sm:$0xff]
    %v109 = vld [vmem:[#allocation2 + $0xa0] sm:$0xff]
    %v110 = vld [vmem:[#allocation2 + $0xa8] sm:$0xff]
    %v111 = vld [vmem:[#allocation2 + $0xb0] sm:$0xff]
    %v112 = vld [vmem:[#allocation2 + $0xb8] sm:$0xff]
    %v113 = vld [vmem:[#allocation2 + $0xc0] sm:$0xff]
    %v114 = vld [vmem:[#allocation2 + $0xc8] sm:$0xff]
    %v115 = vld [vmem:[#allocation2 + $0xd0] sm:$0xff]
    %v116 = vld [vmem:[#allocation2 + $0xd8] sm:$0xff]
    %v117 = vld [vmem:[#allocation2 + $0xe0] sm:$0xff]
    %v118 = vld [vmem:[#allocation2 + $0xe8] sm:$0xff]
    %v119 = vld [vmem:[#allocation2 + $0xf0] sm:$0xff]
    %v120 = vld [vmem:[#allocation2 + $0xf8] sm:$0xff]
    %v121 = vld [vmem:[#allocation8] sm:$0xff]
    %v122 = vld [vmem:[#allocation8 + $0x18] sm:$0xff]
    %v123 = vld [vmem:[#allocation8 + $0x30] sm:$0xff]
    %v124 = vld [vmem:[#allocation8 + $0x48] sm:$0xff]
    %v125 = vld [vmem:[#allocation8 + $0x60] sm:$0xff]
    %v126 = vld [vmem:[#allocation8 + $0x78] sm:$0xff]
    %v127 = vld [vmem:[#allocation8 + $0x90] sm:$0xff]
    %v128 = vld [vmem:[#allocation8 + $0xa8] sm:$0xff]
    %v129 = vld [vmem:[#allocation8 + $0xc0] sm:$0xff]
    %v130 = vld [vmem:[#allocation8 + $0xd8] sm:$0xff]
    %v131 = vld [vmem:[#allocation8 + $0xf0] sm:$0xff]
    %v132 = vld [vmem:[#allocation8 + $0x108] sm:$0xff]
    %v133 = vld [vmem:[#allocation8 + $0x120] sm:$0xff]
    %v134 = vld [vmem:[#allocation8 + $0x138] sm:$0xff]
    %v135 = vld [vmem:[#allocation8 + $0x150] sm:$0xff]
    %v136 = vld [vmem:[#allocation8 + $0x168] sm:$0xff]
    %137 = vmatprep.subr.mxu0 0.0
    %138 = vmatpush1.msra.mxu0 %v121
    %139 = vmatprep.subr.mxu0 0.0
    %140 = vmatpush1.msra.mxu0 %v122
    %141 = vmatprep.subr.mxu0 0.0
    %142 = vmatpush1.msra.mxu0 %v123
    %143 = vmatprep.subr.mxu0 0.0
    %144 = vmatpush1.msra.mxu0 %v124
    %145 = vmatprep.subr.mxu0 0.0
    %146 = vmatpush1.msra.mxu0 %v125
    %147 = vmatprep.subr.mxu0 0.0
    %148 = vmatpush1.msra.mxu0 %v126
    %149 = vmatprep.subr.mxu0 0.0
    %150 = vmatpush1.msra.mxu0 %v127
    %151 = vmatprep.subr.mxu0 0.0
    %152 = vmatpush1.msra.mxu0 %v128
    %153 = vmatprep.subr.mxu0 0.0
    %154 = vmatpush1.msra.mxu0 %v129
    %155 = vmatprep.subr.mxu0 0.0
    %156 = vmatpush1.msra.mxu0 %v130
    %157 = vmatprep.subr.mxu0 0.0
    %158 = vmatpush1.msra.mxu0 %v131
    %159 = vmatprep.subr.mxu0 0.0
    %160 = vmatpush1.msra.mxu0 %v132
    %161 = vmatprep.subr.mxu0 0.0
    %162 = vmatpush1.msra.mxu0 %v133
    %163 = vmatprep.subr.mxu0 0.0
    %164 = vmatpush1.msra.mxu0 %v134
    %165 = vmatprep.subr.mxu0 0.0
    %166 = vmatpush1.msra.mxu0 %v135
    %167 = vmatprep.subr.mxu0 0.0
    %168 = vmatpush1.msra.mxu0 %v136
    %169 = vmatprep.subr.mxu0 0.0
    %170 = vmatpush1.msra.mxu0 0.0
    %171 = vmatprep.subr.mxu0 0.0
    %172 = vmatpush1.msra.mxu0 0.0
    %173 = vmatprep.subr.mxu0 0.0
    %174 = vmatpush1.msra.mxu0 0.0
    %175 = vmatprep.subr.mxu0 0.0
    %176 = vmatpush1.msra.mxu0 0.0
    %177 = vmatprep.subr.mxu0 0.0
    %178 = vmatpush1.msra.mxu0 0.0
    %179 = vmatprep.subr.mxu0 0.0
    %180 = vmatpush1.msra.mxu0 0.0
    %181 = vmatprep.subr.mxu0 0.0
    %182 = vmatpush1.msra.mxu0 0.0
    %183 = vmatprep.subr.mxu0 0.0
    %184 = vmatpush1.msra.mxu0 0.0
    %185 = vmatprep.subr.mxu0 0.0
    %186 = vmatpush1.msra.mxu0 0.0
    %187 = vmatprep.subr.mxu0 0.0
    %188 = vmatpush1.msra.mxu0 0.0
    %189 = vmatprep.subr.mxu0 0.0
    %190 = vmatpush1.msra.mxu0 0.0
    %191 = vmatprep.subr.mxu0 0.0
    %192 = vmatpush1.msra.mxu0 0.0
    %193 = vmatprep.subr.mxu0 0.0
    %194 = vmatpush1.msra.mxu0 0.0
    %195 = vmatprep.subr.mxu0 0.0
    %196 = vmatpush1.msra.mxu0 0.0
    %197 = vmatprep.subr.mxu0 0.0
    %198 = vmatpush1.msra.mxu0 0.0
    %199 = vmatprep.subr.mxu0 0.0
    %200 = vmatpush1.msra.mxu0 0.0
    %201 = vmatprep.mubr.f32.mxu0 0.0
    %202 = vmatmul.mubr.f32.gmra.mrb[0].mxu0 %v89
    %v203 = vpop.f32.mrb[0].mxu0
    %v204 = vadd.f32 0.0, %v203
    %v205 = vpop.f32.mrb[0].mxu0
    %206 = vmatprep.mubr.f32.mxu0 0.0
    %207 = vmatmul.mubr.f32.gmra.mrb[0].mxu0 %v90
    %v208 = vpop.f32.mrb[0].mxu0
    %v209 = vadd.f32 0.0, %v208
    %v210 = vpop.f32.mrb[0].mxu0
    %211 = vmatprep.mubr.f32.mxu0 0.0
    %212 = vmatmul.mubr.f32.gmra.mrb[0].mxu0 %v91
    %v213 = vpop.f32.mrb[0].mxu0
    %v214 = vadd.f32 0.0, %v213
    %v215 = vpop.f32.mrb[0].mxu0
    %216 = vmatprep.mubr.f32.mxu0 0.0
    %217 = vmatmul.mubr.f32.gmra.mrb[0].mxu0 %v92
    %v218 = vpop.f32.mrb[0].mxu0
    %v219 = vadd.f32 0.0, %v218
    %v220 = vpop.f32.mrb[0].mxu0
    %221 = vmatprep.mubr.f32.mxu0 0.0
    %222 = vmatmul.mubr.f32.gmra.mrb[0].mxu0 %v93
    %v223 = vpop.f32.mrb[0].mxu0
    %v224 = vadd.f32 0.0, %v223
    %v225 = vpop.f32.mrb[0].mxu0
    %226 = vmatprep.mubr.f32.mxu0 0.0
    %227 = vmatmul.mubr.f32.gmra.mrb[0].mxu0 %v94
    %v228 = vpop.f32.mrb[0].mxu0
    %v229 = vadd.f32 0.0, %v228
    %v230 = vpop.f32.mrb[0].mxu0
    %231 = vmatprep.mubr.f32.mxu0 0.0
    %232 = vmatmul.mubr.f32.gmra.mrb[0].mxu0 %v95
    %v233 = vpop.f32.mrb[0].mxu0
    %v234 = vadd.f32 0.0, %v233
    %v235 = vpop.f32.mrb[0].mxu0
    %236 = vmatprep.mubr.f32.mxu0 0.0
    %237 = vmatmul.mubr.f32.gmra.mrb[0].mxu0 %v96
    %v238 = vpop.f32.mrb[0].mxu0
    %v239 = vadd.f32 0.0, %v238
    %v240 = vpop.f32.mrb[0].mxu0
    %241 = vmatprep.mubr.f32.mxu0 0.0
    %242 = vmatmul.mubr.f32.gmra.mrb[0].mxu0 %v97
    %v243 = vpop.f32.mrb[0].mxu0
    %v244 = vadd.f32 0.0, %v243
    %v245 = vpop.f32.mrb[0].mxu0
    %246 = vmatprep.mubr.f32.mxu0 0.0
    %247 = vmatmul.mubr.f32.gmra.mrb[0].mxu0 %v98
    %v248 = vpop.f32.mrb[0].mxu0
    %v249 = vadd.f32 0.0, %v248
    %v250 = vpop.f32.mrb[0].mxu0
    %251 = vmatprep.mubr.f32.mxu0 0.0
    %252 = vmatmul.mubr.f32.gmra.mrb[0].mxu0 %v99
    %v253 = vpop.f32.mrb[0].mxu0
    %v254 = vadd.f32 0.0, %v253
    %v255 = vpop.f32.mrb[0].mxu0
    %256 = vmatprep.mubr.f32.mxu0 0.0
    %257 = vmatmul.mubr.f32.gmra.mrb[0].mxu0 %v100
    %v258 = vpop.f32.mrb[0].mxu0
    %v259 = vadd.f32 0.0, %v258
    %v260 = vpop.f32.mrb[0].mxu0
    %261 = vmatprep.mubr.f32.mxu0 0.0
    %262 = vmatmul.mubr.f32.gmra.mrb[0].mxu0 %v101
    %v263 = vpop.f32.mrb[0].mxu0
    %v264 = vadd.f32 0.0, %v263
    %v265 = vpop.f32.mrb[0].mxu0
    %266 = vmatprep.mubr.f32.mxu0 0.0
    %267 = vmatmul.mubr.f32.gmra.mrb[0].mxu0 %v102
    %v268 = vpop.f32.mrb[0].mxu0
    %v269 = vadd.f32 0.0, %v268
    %v270 = vpop.f32.mrb[0].mxu0
    %271 = vmatprep.mubr.f32.mxu0 0.0
    %272 = vmatmul.mubr.f32.gmra.mrb[0].mxu0 %v103
    %v273 = vpop.f32.mrb[0].mxu0
    %v274 = vadd.f32 0.0, %v273
    %v275 = vpop.f32.mrb[0].mxu0
    %276 = vmatprep.mubr.f32.mxu0 0.0
    %277 = vmatmul.mubr.f32.gmra.mrb[0].mxu0 %v104
    %v278 = vpop.f32.mrb[0].mxu0
    %v279 = vadd.f32 0.0, %v278
    %v280 = vpop.f32.mrb[0].mxu0
    %281 = vmatprep.mubr.f32.mxu0 0.0
    %282 = vmatmul.mubr.f32.gmra.mrb[0].mxu0 %v105
    %v283 = vpop.f32.mrb[0].mxu0
    %v284 = vadd.f32 0.0, %v283
    %v285 = vpop.f32.mrb[0].mxu0
    %286 = vmatprep.mubr.f32.mxu0 0.0
    %287 = vmatmul.mubr.f32.gmra.mrb[0].mxu0 %v106
    %v288 = vpop.f32.mrb[0].mxu0
    %v289 = vadd.f32 0.0, %v288
    %v290 = vpop.f32.mrb[0].mxu0
    %291 = vmatprep.mubr.f32.mxu0 0.0
    %292 = vmatmul.mubr.f32.gmra.mrb[0].mxu0 %v107
    %v293 = vpop.f32.mrb[0].mxu0
    %v294 = vadd.f32 0.0, %v293
    %v295 = vpop.f32.mrb[0].mxu0
    %296 = vmatprep.mubr.f32.mxu0 0.0
    %297 = vmatmul.mubr.f32.gmra.mrb[0].mxu0 %v108
    %v298 = vpop.f32.mrb[0].mxu0
    %v299 = vadd.f32 0.0, %v298
    %v300 = vpop.f32.mrb[0].mxu0
    %301 = vmatprep.mubr.f32.mxu0 0.0
    %302 = vmatmul.mubr.f32.gmra.mrb[0].mxu0 %v109
    %v303 = vpop.f32.mrb[0].mxu0
    %v304 = vadd.f32 0.0, %v303
    %v305 = vpop.f32.mrb[0].mxu0
    %306 = vmatprep.mubr.f32.mxu0 0.0
    %307 = vmatmul.mubr.f32.gmra.mrb[0].mxu0 %v110
    %v308 = vpop.f32.mrb[0].mxu0
    %v309 = vadd.f32 0.0, %v308
    %v310 = vpop.f32.mrb[0].mxu0
    %311 = vmatprep.mubr.f32.mxu0 0.0
    %312 = vmatmul.mubr.f32.gmra.mrb[0].mxu0 %v111
    %v313 = vpop.f32.mrb[0].mxu0
    %v314 = vadd.f32 0.0, %v313
    %v315 = vpop.f32.mrb[0].mxu0
    %316 = vmatprep.mubr.f32.mxu0 0.0
    %317 = vmatmul.mubr.f32.gmra.mrb[0].mxu0 %v112
    %v318 = vpop.f32.mrb[0].mxu0
    %v319 = vadd.f32 0.0, %v318
    %v320 = vpop.f32.mrb[0].mxu0
    %321 = vmatprep.mubr.f32.mxu0 0.0
    %322 = vmatmul.mubr.f32.gmra.mrb[0].mxu0 %v113
    %v323 = vpop.f32.mrb[0].mxu0
    %v324 = vadd.f32 0.0, %v323
    %v325 = vpop.f32.mrb[0].mxu0
    %326 = vmatprep.mubr.f32.mxu0 0.0
    %327 = vmatmul.mubr.f32.gmra.mrb[0].mxu0 %v114
    %v328 = vpop.f32.mrb[0].mxu0
    %v329 = vadd.f32 0.0, %v328
    %v330 = vpop.f32.mrb[0].mxu0
    %331 = vmatprep.mubr.f32.mxu0 0.0
    %332 = vmatmul.mubr.f32.gmra.mrb[0].mxu0 %v115
    %v333 = vpop.f32.mrb[0].mxu0
    %v334 = vadd.f32 0.0, %v333
    %v335 = vpop.f32.mrb[0].mxu0
    %336 = vmatprep.mubr.f32.mxu0 0.0
    %337 = vmatmul.mubr.f32.gmra.mrb[0].mxu0 %v116
    %v338 = vpop.f32.mrb[0].mxu0
    %v339 = vadd.f32 0.0, %v338
    %v340 = vpop.f32.mrb[0].mxu0
    %341 = vmatprep.mubr.f32.mxu0 0.0
    %342 = vmatmul.mubr.f32.gmra.mrb[0].mxu0 %v117
    %v343 = vpop.f32.mrb[0].mxu0
    %v344 = vadd.f32 0.0, %v343
    %v345 = vpop.f32.mrb[0].mxu0
    %346 = vmatprep.mubr.f32.mxu0 0.0
    %347 = vmatmul.mubr.f32.gmra.mrb[0].mxu0 %v118
    %v348 = vpop.f32.mrb[0].mxu0
    %v349 = vadd.f32 0.0, %v348
    %v350 = vpop.f32.mrb[0].mxu0
    %351 = vmatprep.mubr.f32.mxu0 0.0
    %352 = vmatmul.mubr.f32.gmra.mrb[0].mxu0 %v119
    %v353 = vpop.f32.mrb[0].mxu0
    %v354 = vadd.f32 0.0, %v353
    %v355 = vpop.f32.mrb[0].mxu0
    %356 = vmatprep.mubr.f32.mxu0 0.0
    %357 = vmatmul.mubr.f32.gmra.mrb[0].mxu0 %v120
    %v358 = vpop.f32.mrb[0].mxu0
    %v359 = vadd.f32 0.0, %v358
    %v360 = vpop.f32.mrb[0].mxu0
    %361 = vdwg.mxu0
    %v362 = vld [vmem:[#allocation5] sm:$0xff]
    %v363 = vld [vmem:[#allocation5 + $0x8] sm:$0xff]
    %v364 = vld [vmem:[#allocation5 + $0x10] sm:$0xff]
    %v365 = vld [vmem:[#allocation5 + $0x18] sm:$0xff]
    %v366 = vld [vmem:[#allocation5 + $0x20] sm:$0xff]
    %v367 = vld [vmem:[#allocation5 + $0x28] sm:$0xff]
    %v368 = vld [vmem:[#allocation5 + $0x30] sm:$0xff]
    %v369 = vld [vmem:[#allocation5 + $0x38] sm:$0xff]
    %v370 = vld [vmem:[#allocation5 + $0x40] sm:$0xff]
    %v371 = vld [vmem:[#allocation5 + $0x48] sm:$0xff]
    %v372 = vld [vmem:[#allocation5 + $0x50] sm:$0xff]
    %v373 = vld [vmem:[#allocation5 + $0x58] sm:$0xff]
    %v374 = vld [vmem:[#allocation5 + $0x60] sm:$0xff]
    %v375 = vld [vmem:[#allocation5 + $0x68] sm:$0xff]
    %v376 = vld [vmem:[#allocation5 + $0x70] sm:$0xff]
    %v377 = vld [vmem:[#allocation5 + $0x78] sm:$0xff]
    %v378 = vld [vmem:[#allocation5 + $0x80] sm:$0xff]
    %v379 = vld [vmem:[#allocation5 + $0x88] sm:$0xff]
    %v380 = vld [vmem:[#allocation5 + $0x90] sm:$0xff]
    %v381 = vld [vmem:[#allocation5 + $0x98] sm:$0xff]
    %v382 = vld [vmem:[#allocation5 + $0xa0] sm:$0xff]
    %v383 = vld [vmem:[#allocation5 + $0xa8] sm:$0xff]
    %v384 = vld [vmem:[#allocation5 + $0xb0] sm:$0xff]
    %v385 = vld [vmem:[#allocation5 + $0xb8] sm:$0xff]
    %v386 = vld [vmem:[#allocation5 + $0xc0] sm:$0xff]
    %v387 = vld [vmem:[#allocation5 + $0xc8] sm:$0xff]
    %v388 = vld [vmem:[#allocation5 + $0xd0] sm:$0xff]
    %v389 = vld [vmem:[#allocation5 + $0xd8] sm:$0xff]
    %v390 = vld [vmem:[#allocation5 + $0xe0] sm:$0xff]
    %v391 = vld [vmem:[#allocation5 + $0xe8] sm:$0xff]
    %v392 = vld [vmem:[#allocation5 + $0xf0] sm:$0xff]
    %v393 = vld [vmem:[#allocation5 + $0xf8] sm:$0xff]
    %v394 = vld [vmem:[#allocation8 + $0x8] sm:$0xff]
    %v395 = vld [vmem:[#allocation8 + $0x20] sm:$0xff]
    %v396 = vld [vmem:[#allocation8 + $0x38] sm:$0xff]
    %v397 = vld [vmem:[#allocation8 + $0x50] sm:$0xff]
    %v398 = vld [vmem:[#allocation8 + $0x68] sm:$0xff]
    %v399 = vld [vmem:[#allocation8 + $0x80] sm:$0xff]
    %v400 = vld [vmem:[#allocation8 + $0x98] sm:$0xff]
    %v401 = vld [vmem:[#allocation8 + $0xb0] sm:$0xff]
    %v402 = vld [vmem:[#allocation8 + $0xc8] sm:$0xff]
    %v403 = vld [vmem:[#allocation8 + $0xe0] sm:$0xff]
    %v404 = vld [vmem:[#allocation8 + $0xf8] sm:$0xff]
    %v405 = vld [vmem:[#allocation8 + $0x110] sm:$0xff]
    %v406 = vld [vmem:[#allocation8 + $0x128] sm:$0xff]
    %v407 = vld [vmem:[#allocation8 + $0x140] sm:$0xff]
    %v408 = vld [vmem:[#allocation8 + $0x158] sm:$0xff]
    %v409 = vld [vmem:[#allocation8 + $0x170] sm:$0xff]
    %410 = vmatprep.subr.mxu0 0.0
    %411 = vmatpush1.msra.mxu0 %v394
    %412 = vmatprep.subr.mxu0 0.0
    %413 = vmatpush1.msra.mxu0 %v395
    %414 = vmatprep.subr.mxu0 0.0
    %415 = vmatpush1.msra.mxu0 %v396
    %416 = vmatprep.subr.mxu0 0.0
    %417 = vmatpush1.msra.mxu0 %v397
    %418 = vmatprep.subr.mxu0 0.0
    %419 = vmatpush1.msra.mxu0 %v398
    %420 = vmatprep.subr.mxu0 0.0
    %421 = vmatpush1.msra.mxu0 %v399
    %422 = vmatprep.subr.mxu0 0.0
    %423 = vmatpush1.msra.mxu0 %v400
    %424 = vmatprep.subr.mxu0 0.0
    %425 = vmatpush1.msra.mxu0 %v401
    %426 = vmatprep.subr.mxu0 0.0
    %427 = vmatpush1.msra.mxu0 %v402
    %428 = vmatprep.subr.mxu0 0.0
    %429 = vmatpush1.msra.mxu0 %v403
    %430 = vmatprep.subr.mxu0 0.0
    %431 = vmatpush1.msra.mxu0 %v404
    %432 = vmatprep.subr.mxu0 0.0
    %433 = vmatpush1.msra.mxu0 %v405
    %434 = vmatprep.subr.mxu0 0.0
    %435 = vmatpush1.msra.mxu0 %v406
    %436 = vmatprep.subr.mxu0 0.0
    %437 = vmatpush1.msra.mxu0 %v407
    %438 = vmatprep.subr.mxu0 0.0
    %439 = vmatpush1.msra.mxu0 %v408
    %440 = vmatprep.subr.mxu0 0.0
    %441 = vmatpush1.msra.mxu0 %v409
    %442 = vmatprep.subr.mxu0 0.0
    %443 = vmatpush1.msra.mxu0 0.0
    %444 = vmatprep.subr.mxu0 0.0
    %445 = vmatpush1.msra.mxu0 0.0
    %446 = vmatprep.subr.mxu0 0.0
    %447 = vmatpush1.msra.mxu0 0.0
    %448 = vmatprep.subr.mxu0 0.0
    %449 = vmatpush1.msra.mxu0 0.0
    %450 = vmatprep.subr.mxu0 0.0
    %451 = vmatpush1.msra.mxu0 0.0
    %452 = vmatprep.subr.mxu0 0.0
    %453 = vmatpush1.msra.mxu0 0.0
    %454 = vmatprep.subr.mxu0 0.0
    %455 = vmatpush1.msra.mxu0 0.0
    %456 = vmatprep.subr.mxu0 0.0
    %457 = vmatpush1.msra.mxu0 0.0
    %458 = vmatprep.subr.mxu0 0.0
    %459 = vmatpush1.msra.mxu0 0.0
    %460 = vmatprep.subr.mxu0 0.0
    %461 = vmatpush1.msra.mxu0 0.0
    %462 = vmatprep.subr.mxu0 0.0
    %463 = vmatpush1.msra.mxu0 0.0
    %464 = vmatprep.subr.mxu0 0.0
    %465 = vmatpush1.msra.mxu0 0.0
    %466 = vmatprep.subr.mxu0 0.0
    %467 = vmatpush1.msra.mxu0 0.0
    %468 = vmatprep.subr.mxu0 0.0
    %469 = vmatpush1.msra.mxu0 0.0
    %470 = vmatprep.subr.mxu0 0.0
    %471 = vmatpush1.msra.mxu0 0.0
    %472 = vmatprep.subr.mxu0 0.0
    %473 = vmatpush1.msra.mxu0 0.0
    %474 = vmatprep.mubr.f32.mxu0 0.0
    %475 = vmatmul.mubr.f32.gmra.mrb[0].mxu0 %v362
    %v476 = vpop.f32.mrb[0].mxu0
    %v477 = vadd.f32 0.0, %v476
    %v478 = vpop.f32.mrb[0].mxu0
    %479 = vmatprep.mubr.f32.mxu0 0.0
    %480 = vmatmul.mubr.f32.gmra.mrb[0].mxu0 %v363
    %v481 = vpop.f32.mrb[0].mxu0
    %v482 = vadd.f32 0.0, %v481
    %v483 = vpop.f32.mrb[0].mxu0
    %484 = vmatprep.mubr.f32.mxu0 0.0
    %485 = vmatmul.mubr.f32.gmra.mrb[0].mxu0 %v364
    %v486 = vpop.f32.mrb[0].mxu0
    %v487 = vadd.f32 0.0, %v486
    %v488 = vpop.f32.mrb[0].mxu0
    %489 = vmatprep.mubr.f32.mxu0 0.0
    %490 = vmatmul.mubr.f32.gmra.mrb[0].mxu0 %v365
    %v491 = vpop.f32.mrb[0].mxu0
    %v492 = vadd.f32 0.0, %v491
    %v493 = vpop.f32.mrb[0].mxu0
    %494 = vmatprep.mubr.f32.mxu0 0.0
    %495 = vmatmul.mubr.f32.gmra.mrb[0].mxu0 %v366
    %v496 = vpop.f32.mrb[0].mxu0
    %v497 = vadd.f32 0.0, %v496
    %v498 = vpop.f32.mrb[0].mxu0
    %499 = vmatprep.mubr.f32.mxu0 0.0
    %500 = vmatmul.mubr.f32.gmra.mrb[0].mxu0 %v367
    %v501 = vpop.f32.mrb[0].mxu0
    %v502 = vadd.f32 0.0, %v501
    %v503 = vpop.f32.mrb[0].mxu0
    %504 = vmatprep.mubr.f32.mxu0 0.0
    %505 = vmatmul.mubr.f32.gmra.mrb[0].mxu0 %v368
    %v506 = vpop.f32.mrb[0].mxu0
    %v507 = vadd.f32 0.0, %v506
    %v508 = vpop.f32.mrb[0].mxu0
    %509 = vmatprep.mubr.f32.mxu0 0.0
    %510 = vmatmul.mubr.f32.gmra.mrb[0].mxu0 %v369
    %v511 = vpop.f32.mrb[0].mxu0
    %v512 = vadd.f32 0.0, %v511
    %v513 = vpop.f32.mrb[0].mxu0
    %514 = vmatprep.mubr.f32.mxu0 0.0
    %515 = vmatmul.mubr.f32.gmra.mrb[0].mxu0 %v370
    %v516 = vpop.f32.mrb[0].mxu0
    %v517 = vadd.f32 0.0, %v516
    %v518 = vpop.f32.mrb[0].mxu0
    %519 = vmatprep.mubr.f32.mxu0 0.0
    %520 = vmatmul.mubr.f32.gmra.mrb[0].mxu0 %v371
    %v521 = vpop.f32.mrb[0].mxu0
    %v522 = vadd.f32 0.0, %v521
    %v523 = vpop.f32.mrb[0].mxu0
    %524 = vmatprep.mubr.f32.mxu0 0.0
    %525 = vmatmul.mubr.f32.gmra.mrb[0].mxu0 %v372
    %v526 = vpop.f32.mrb[0].mxu0
    %v527 = vadd.f32 0.0, %v526
    %v528 = vpop.f32.mrb[0].mxu0
    %529 = vmatprep.mubr.f32.mxu0 0.0
    %530 = vmatmul.mubr.f32.gmra.mrb[0].mxu0 %v373
    %v531 = vpop.f32.mrb[0].mxu0
    %v532 = vadd.f32 0.0, %v531
    %v533 = vpop.f32.mrb[0].mxu0
    %534 = vmatprep.mubr.f32.mxu0 0.0
    %535 = vmatmul.mubr.f32.gmra.mrb[0].mxu0 %v374
    %v536 = vpop.f32.mrb[0].mxu0
    %v537 = vadd.f32 0.0, %v536
    %v538 = vpop.f32.mrb[0].mxu0
    %539 = vmatprep.mubr.f32.mxu0 0.0
    %540 = vmatmul.mubr.f32.gmra.mrb[0].mxu0 %v375
    %v541 = vpop.f32.mrb[0].mxu0
    %v542 = vadd.f32 0.0, %v541
    %v543 = vpop.f32.mrb[0].mxu0
    %544 = vmatprep.mubr.f32.mxu0 0.0
    %545 = vmatmul.mubr.f32.gmra.mrb[0].mxu0 %v376
    %v546 = vpop.f32.mrb[0].mxu0
    %v547 = vadd.f32 0.0, %v546
    %v548 = vpop.f32.mrb[0].mxu0
    %549 = vmatprep.mubr.f32.mxu0 0.0
    %550 = vmatmul.mubr.f32.gmra.mrb[0].mxu0 %v377
    %v551 = vpop.f32.mrb[0].mxu0
    %v552 = vadd.f32 0.0, %v551
    %v553 = vpop.f32.mrb[0].mxu0
    %554 = vmatprep.mubr.f32.mxu0 0.0
    %555 = vmatmul.mubr.f32.gmra.mrb[0].mxu0 %v378
    %v556 = vpop.f32.mrb[0].mxu0
    %v557 = vadd.f32 0.0, %v556
    %v558 = vpop.f32.mrb[0].mxu0
    %559 = vmatprep.mubr.f32.mxu0 0.0
    %560 = vmatmul.mubr.f32.gmra.mrb[0].mxu0 %v379
    %v561 = vpop.f32.mrb[0].mxu0
    %v562 = vadd.f32 0.0, %v561
    %v563 = vpop.f32.mrb[0].mxu0
    %564 = vmatprep.mubr.f32.mxu0 0.0
    %565 = vmatmul.mubr.f32.gmra.mrb[0].mxu0 %v380
    %v566 = vpop.f32.mrb[0].mxu0
    %v567 = vadd.f32 0.0, %v566
    %v568 = vpop.f32.mrb[0].mxu0
    %569 = vmatprep.mubr.f32.mxu0 0.0
    %570 = vmatmul.mubr.f32.gmra.mrb[0].mxu0 %v381
    %v571 = vpop.f32.mrb[0].mxu0
    %v572 = vadd.f32 0.0, %v571
    %v573 = vpop.f32.mrb[0].mxu0
    %574 = vmatprep.mubr.f32.mxu0 0.0
    %575 = vmatmul.mubr.f32.gmra.mrb[0].mxu0 %v382
    %v576 = vpop.f32.mrb[0].mxu0
    %v577 = vadd.f32 0.0, %v576
    %v578 = vpop.f32.mrb[0].mxu0
    %579 = vmatprep.mubr.f32.mxu0 0.0
    %580 = vmatmul.mubr.f32.gmra.mrb[0].mxu0 %v383
    %v581 = vpop.f32.mrb[0].mxu0
    %v582 = vadd.f32 0.0, %v581
    %v583 = vpop.f32.mrb[0].mxu0
    %584 = vmatprep.mubr.f32.mxu0 0.0
    %585 = vmatmul.mubr.f32.gmra.mrb[0].mxu0 %v384
    %v586 = vpop.f32.mrb[0].mxu0
    %v587 = vadd.f32 0.0, %v586
    %v588 = vpop.f32.mrb[0].mxu0
    %589 = vmatprep.mubr.f32.mxu0 0.0
    %590 = vmatmul.mubr.f32.gmra.mrb[0].mxu0 %v385
    %v591 = vpop.f32.mrb[0].mxu0
    %v592 = vadd.f32 0.0, %v591
    %v593 = vpop.f32.mrb[0].mxu0
    %594 = vmatprep.mubr.f32.mxu0 0.0
    %595 = vmatmul.mubr.f32.gmra.mrb[0].mxu0 %v386
    %v596 = vpop.f32.mrb[0].mxu0
    %v597 = vadd.f32 0.0, %v596
    %v598 = vpop.f32.mrb[0].mxu0
    %599 = vmatprep.mubr.f32.mxu0 0.0
    %600 = vmatmul.mubr.f32.gmra.mrb[0].mxu0 %v387
    %v601 = vpop.f32.mrb[0].mxu0
    %v602 = vadd.f32 0.0, %v601
    %v603 = vpop.f32.mrb[0].mxu0
    %604 = vmatprep.mubr.f32.mxu0 0.0
    %605 = vmatmul.mubr.f32.gmra.mrb[0].mxu0 %v388
    %v606 = vpop.f32.mrb[0].mxu0
    %v607 = vadd.f32 0.0, %v606
    %v608 = vpop.f32.mrb[0].mxu0
    %609 = vmatprep.mubr.f32.mxu0 0.0
    %610 = vmatmul.mubr.f32.gmra.mrb[0].mxu0 %v389
    %v611 = vpop.f32.mrb[0].mxu0
    %v612 = vadd.f32 0.0, %v611
    %v613 = vpop.f32.mrb[0].mxu0
    %614 = vmatprep.mubr.f32.mxu0 0.0
    %615 = vmatmul.mubr.f32.gmra.mrb[0].mxu0 %v390
    %v616 = vpop.f32.mrb[0].mxu0
    %v617 = vadd.f32 0.0, %v616
    %v618 = vpop.f32.mrb[0].mxu0
    %619 = vmatprep.mubr.f32.mxu0 0.0
    %620 = vmatmul.mubr.f32.gmra.mrb[0].mxu0 %v391
    %v621 = vpop.f32.mrb[0].mxu0
    %v622 = vadd.f32 0.0, %v621
    %v623 = vpop.f32.mrb[0].mxu0
    %624 = vmatprep.mubr.f32.mxu0 0.0
    %625 = vmatmul.mubr.f32.gmra.mrb[0].mxu0 %v392
    %v626 = vpop.f32.mrb[0].mxu0
    %v627 = vadd.f32 0.0, %v626
    %v628 = vpop.f32.mrb[0].mxu0
    %629 = vmatprep.mubr.f32.mxu0 0.0
    %630 = vmatmul.mubr.f32.gmra.mrb[0].mxu0 %v393
    %v631 = vpop.f32.mrb[0].mxu0
    %v632 = vadd.f32 0.0, %v631
    %v633 = vpop.f32.mrb[0].mxu0
    %634 = vdwg.mxu0
    %v635 = vmul.f32 %v477, %v204
    %v636 = vmul.f32 %v482, %v209
    %v637 = vmul.f32 %v487, %v214
    %v638 = vmul.f32 %v492, %v219
    %v639 = vmul.f32 %v497, %v224
    %v640 = vmul.f32 %v502, %v229
    %v641 = vmul.f32 %v507, %v234
    %v642 = vmul.f32 %v512, %v239
    %v643 = vmul.f32 %v517, %v244
    %v644 = vmul.f32 %v522, %v249
    %v645 = vmul.f32 %v527, %v254
    %v646 = vmul.f32 %v532, %v259
    %v647 = vmul.f32 %v537, %v264
    %v648 = vmul.f32 %v542, %v269
    %v649 = vmul.f32 %v547, %v274
    %v650 = vmul.f32 %v552, %v279
    %v651 = vmul.f32 %v557, %v284
    %v652 = vmul.f32 %v562, %v289
    %v653 = vmul.f32 %v567, %v294
    %v654 = vmul.f32 %v572, %v299
    %v655 = vmul.f32 %v577, %v304
    %v656 = vmul.f32 %v582, %v309
    %v657 = vmul.f32 %v587, %v314
    %v658 = vmul.f32 %v592, %v319
    %v659 = vmul.f32 %v597, %v324
    %v660 = vmul.f32 %v602, %v329
    %v661 = vmul.f32 %v607, %v334
    %v662 = vmul.f32 %v612, %v339
    %v663 = vmul.f32 %v617, %v344
    %v664 = vmul.f32 %v622, %v349
    %v665 = vmul.f32 %v627, %v354
    %v666 = vmul.f32 %v632, %v359
    %667 = vmax.xlane.f32.xlu0 %v635
    %v668 = vpop.xlane.xlu0 %667
    %669 = vmax.xlane.f32.xlu0 %v636
    %v670 = vpop.xlane.xlu0 %669
    %671 = vmax.xlane.f32.xlu0 %v637
    %v672 = vpop.xlane.xlu0 %671
    %673 = vmax.xlane.f32.xlu0 %v638
    %v674 = vpop.xlane.xlu0 %673
    %675 = vmax.xlane.f32.xlu0 %v639
    %v676 = vpop.xlane.xlu0 %675
    %677 = vmax.xlane.f32.xlu0 %v640
    %v678 = vpop.xlane.xlu0 %677
    %679 = vmax.xlane.f32.xlu0 %v641
    %v680 = vpop.xlane.xlu0 %679
    %681 = vmax.xlane.f32.xlu0 %v642
    %v682 = vpop.xlane.xlu0 %681
    %683 = vmax.xlane.f32.xlu0 %v643
    %v684 = vpop.xlane.xlu0 %683
    %685 = vmax.xlane.f32.xlu0 %v644
    %v686 = vpop.xlane.xlu0 %685
    %687 = vmax.xlane.f32.xlu0 %v645
    %v688 = vpop.xlane.xlu0 %687
    %689 = vmax.xlane.f32.xlu0 %v646
    %v690 = vpop.xlane.xlu0 %689
    %691 = vmax.xlane.f32.xlu0 %v647
    %v692 = vpop.xlane.xlu0 %691
    %693 = vmax.xlane.f32.xlu0 %v648
    %v694 = vpop.xlane.xlu0 %693
    %695 = vmax.xlane.f32.xlu0 %v649
    %v696 = vpop.xlane.xlu0 %695
    %697 = vmax.xlane.f32.xlu0 %v650
    %v698 = vpop.xlane.xlu0 %697
    %699 = vmax.xlane.f32.xlu0 %v651
    %v700 = vpop.xlane.xlu0 %699
    %701 = vmax.xlane.f32.xlu0 %v652
    %v702 = vpop.xlane.xlu0 %701
    %703 = vmax.xlane.f32.xlu0 %v653
    %v704 = vpop.xlane.xlu0 %703
    %705 = vmax.xlane.f32.xlu0 %v654
    %v706 = vpop.xlane.xlu0 %705
    %707 = vmax.xlane.f32.xlu0 %v655
    %v708 = vpop.xlane.xlu0 %707
    %709 = vmax.xlane.f32.xlu0 %v656
    %v710 = vpop.xlane.xlu0 %709
    %711 = vmax.xlane.f32.xlu0 %v657
    %v712 = vpop.xlane.xlu0 %711
    %713 = vmax.xlane.f32.xlu0 %v658
    %v714 = vpop.xlane.xlu0 %713
    %715 = vmax.xlane.f32.xlu0 %v659
    %v716 = vpop.xlane.xlu0 %715
    %717 = vmax.xlane.f32.xlu0 %v660
    %v718 = vpop.xlane.xlu0 %717
    %719 = vmax.xlane.f32.xlu0 %v661
    %v720 = vpop.xlane.xlu0 %719
    %721 = vmax.xlane.f32.xlu0 %v662
    %v722 = vpop.xlane.xlu0 %721
    %723 = vmax.xlane.f32.xlu0 %v663
    %v724 = vpop.xlane.xlu0 %723
    %725 = vmax.xlane.f32.xlu0 %v664
    %v726 = vpop.xlane.xlu0 %725
    %727 = vmax.xlane.f32.xlu0 %v665
    %v728 = vpop.xlane.xlu0 %727
    %729 = vmax.xlane.f32.xlu0 %v666
    %v730 = vpop.xlane.xlu0 %729
    %v731 = vsub.f32 %v635, %v668
    %v732 = vsub.f32 %v636, %v670
    %v733 = vsub.f32 %v637, %v672
    %v734 = vsub.f32 %v638, %v674
    %v735 = vsub.f32 %v639, %v676
    %v736 = vsub.f32 %v640, %v678
    %v737 = vsub.f32 %v641, %v680
    %v738 = vsub.f32 %v642, %v682
    %v739 = vsub.f32 %v643, %v684
    %v740 = vsub.f32 %v644, %v686
    %v741 = vsub.f32 %v645, %v688
    %v742 = vsub.f32 %v646, %v690
    %v743 = vsub.f32 %v647, %v692
    %v744 = vsub.f32 %v648, %v694
    %v745 = vsub.f32 %v649, %v696
    %v746 = vsub.f32 %v650, %v698
    %v747 = vsub.f32 %v651, %v700
    %v748 = vsub.f32 %v652, %v702
    %v749 = vsub.f32 %v653, %v704
    %v750 = vsub.f32 %v654, %v706
    %v751 = vsub.f32 %v655, %v708
    %v752 = vsub.f32 %v656, %v710
    %v753 = vsub.f32 %v657, %v712
    %v754 = vsub.f32 %v658, %v714
    %v755 = vsub.f32 %v659, %v716
    %v756 = vsub.f32 %v660, %v718
    %v757 = vsub.f32 %v661, %v720
    %v758 = vsub.f32 %v662, %v722
    %v759 = vsub.f32 %v663, %v724
    %v760 = vsub.f32 %v664, %v726
    %v761 = vsub.f32 %v665, %v728
    %v762 = vsub.f32 %v666, %v730
    %v763 = vmul.f32 %v731, 1.442695
    %v764 = vpow.pop %v763
    %v765 = vmul.f32 %v732, 1.442695
    %v766 = vpow.pop %v765
    %v767 = vmul.f32 %v733, 1.442695
    %v768 = vpow.pop %v767
    %v769 = vmul.f32 %v734, 1.442695
    %v770 = vpow.pop %v769
    %v771 = vmul.f32 %v735, 1.442695
    %v772 = vpow.pop %v771
    %v773 = vmul.f32 %v736, 1.442695
    %v774 = vpow.pop %v773
    %v775 = vmul.f32 %v737, 1.442695
    %v776 = vpow.pop %v775
    %v777 = vmul.f32 %v738, 1.442695
    %v778 = vpow.pop %v777
    %v779 = vmul.f32 %v739, 1.442695
    %v780 = vpow.pop %v779
    %v781 = vmul.f32 %v740, 1.442695
    %v782 = vpow.pop %v781
    %v783 = vmul.f32 %v741, 1.442695
    %v784 = vpow.pop %v783
    %v785 = vmul.f32 %v742, 1.442695
    %v786 = vpow.pop %v785
    %v787 = vmul.f32 %v743, 1.442695
    %v788 = vpow.pop %v787
    %v789 = vmul.f32 %v744, 1.442695
    %v790 = vpow.pop %v789
    %v791 = vmul.f32 %v745, 1.442695
    %v792 = vpow.pop %v791
    %v793 = vmul.f32 %v746, 1.442695
    %v794 = vpow.pop %v793
    %v795 = vmul.f32 %v747, 1.442695
    %v796 = vpow.pop %v795
    %v797 = vmul.f32 %v748, 1.442695
    %v798 = vpow.pop %v797
    %v799 = vmul.f32 %v749, 1.442695
    %v800 = vpow.pop %v799
    %v801 = vmul.f32 %v750, 1.442695
    %v802 = vpow.pop %v801
    %v803 = vmul.f32 %v751, 1.442695
    %v804 = vpow.pop %v803
    %v805 = vmul.f32 %v752, 1.442695
    %v806 = vpow.pop %v805
    %v807 = vmul.f32 %v753, 1.442695
    %v808 = vpow.pop %v807
    %v809 = vmul.f32 %v754, 1.442695
    %v810 = vpow.pop %v809
    %v811 = vmul.f32 %v755, 1.442695
    %v812 = vpow.pop %v811
    %v813 = vmul.f32 %v756, 1.442695
    %v814 = vpow.pop %v813
    %v815 = vmul.f32 %v757, 1.442695
    %v816 = vpow.pop %v815
    %v817 = vmul.f32 %v758, 1.442695
    %v818 = vpow.pop %v817
    %v819 = vmul.f32 %v759, 1.442695
    %v820 = vpow.pop %v819
    %v821 = vmul.f32 %v760, 1.442695
    %v822 = vpow.pop %v821
    %v823 = vmul.f32 %v761, 1.442695
    %v824 = vpow.pop %v823
    %v825 = vmul.f32 %v762, 1.442695
    %v826 = vpow.pop %v825
    %v827 = vld [vmem:[#allocation10] sm:$0xff]
    %v828 = vld [vmem:[#allocation10 + $0x8] sm:$0xff]
    %v829 = vld [vmem:[#allocation10 + $0x10] sm:$0xff]
    %v830 = vld [vmem:[#allocation10 + $0x18] sm:$0xff]
    %v831 = vld [vmem:[#allocation10 + $0x20] sm:$0xff]
    %v832 = vld [vmem:[#allocation10 + $0x28] sm:$0xff]
    %v833 = vld [vmem:[#allocation10 + $0x30] sm:$0xff]
    %v834 = vld [vmem:[#allocation10 + $0x38] sm:$0xff]
    %v835 = vld [vmem:[#allocation10 + $0x40] sm:$0xff]
    %v836 = vld [vmem:[#allocation10 + $0x48] sm:$0xff]
    %v837 = vld [vmem:[#allocation10 + $0x50] sm:$0xff]
    %v838 = vld [vmem:[#allocation10 + $0x58] sm:$0xff]
    %v839 = vld [vmem:[#allocation10 + $0x60] sm:$0xff]
    %v840 = vld [vmem:[#allocation10 + $0x68] sm:$0xff]
    %v841 = vld [vmem:[#allocation10 + $0x70] sm:$0xff]
    %v842 = vld [vmem:[#allocation10 + $0x78] sm:$0xff]
    %843 = vmatprep.subr.mxu0 0.0
    %844 = vmatpush1.msra.mxu0 %v827
    %845 = vmatprep.subr.mxu0 0.0
    %846 = vmatpush1.msra.mxu0 %v828
    %847 = vmatprep.subr.mxu0 0.0
    %848 = vmatpush1.msra.mxu0 %v829
    %849 = vmatprep.subr.mxu0 0.0
    %850 = vmatpush1.msra.mxu0 %v830
    %851 = vmatprep.subr.mxu0 0.0
    %852 = vmatpush1.msra.mxu0 %v831
    %853 = vmatprep.subr.mxu0 0.0
    %854 = vmatpush1.msra.mxu0 %v832
    %855 = vmatprep.subr.mxu0 0.0
    %856 = vmatpush1.msra.mxu0 %v833
    %857 = vmatprep.subr.mxu0 0.0
    %858 = vmatpush1.msra.mxu0 %v834
    %859 = vmatprep.subr.mxu0 0.0
    %860 = vmatpush1.msra.mxu0 %v835
    %861 = vmatprep.subr.mxu0 0.0
    %862 = vmatpush1.msra.mxu0 %v836
    %863 = vmatprep.subr.mxu0 0.0
    %864 = vmatpush1.msra.mxu0 %v837
    %865 = vmatprep.subr.mxu0 0.0
    %866 = vmatpush1.msra.mxu0 %v838
    %867 = vmatprep.subr.mxu0 0.0
    %868 = vmatpush1.msra.mxu0 %v839
    %869 = vmatprep.subr.mxu0 0.0
    %870 = vmatpush1.msra.mxu0 %v840
    %871 = vmatprep.subr.mxu0 0.0
    %872 = vmatpush1.msra.mxu0 %v841
    %873 = vmatprep.subr.mxu0 0.0
    %874 = vmatpush1.msra.mxu0 %v842
    %875 = vmatprep.subr.mxu0 0.0
    %876 = vmatpush1.msra.mxu0 0.0
    %877 = vmatprep.subr.mxu0 0.0
    %878 = vmatpush1.msra.mxu0 0.0
    %879 = vmatprep.subr.mxu0 0.0
    %880 = vmatpush1.msra.mxu0 0.0
    %881 = vmatprep.subr.mxu0 0.0
    %882 = vmatpush1.msra.mxu0 0.0
    %883 = vmatprep.subr.mxu0 0.0
    %884 = vmatpush1.msra.mxu0 0.0
    %885 = vmatprep.subr.mxu0 0.0
    %886 = vmatpush1.msra.mxu0 0.0
    %887 = vmatprep.subr.mxu0 0.0
    %888 = vmatpush1.msra.mxu0 0.0
    %889 = vmatprep.subr.mxu0 0.0
    %890 = vmatpush1.msra.mxu0 0.0
    %891 = vmatprep.subr.mxu0 0.0
    %892 = vmatpush1.msra.mxu0 0.0
    %893 = vmatprep.subr.mxu0 0.0
    %894 = vmatpush1.msra.mxu0 0.0
    %895 = vmatprep.subr.mxu0 0.0
    %896 = vmatpush1.msra.mxu0 0.0
    %897 = vmatprep.subr.mxu0 0.0
    %898 = vmatpush1.msra.mxu0 0.0
    %899 = vmatprep.subr.mxu0 0.0
    %900 = vmatpush1.msra.mxu0 0.0
    %901 = vmatprep.subr.mxu0 0.0
    %902 = vmatpush1.msra.mxu0 0.0
    %903 = vmatprep.subr.mxu0 0.0
    %904 = vmatpush1.msra.mxu0 0.0
    %905 = vmatprep.subr.mxu0 0.0
    %906 = vmatpush1.msra.mxu0 0.0
    %907 = vmatprep.mubr.f32.mxu0 0.0
    %908 = vmatmul.mubr.f32.gmra.mrb[0].mxu0 %v764
    %v909 = vpop.f32.mrb[0].mxu0
    %v910 = vadd.f32 0.0, %v909
    %v911 = vpop.f32.mrb[0].mxu0
    %912 = vmatprep.mubr.f32.mxu0 0.0
    %913 = vmatmul.mubr.f32.gmra.mrb[0].mxu0 %v766
    %v914 = vpop.f32.mrb[0].mxu0
    %v915 = vadd.f32 0.0, %v914
    %v916 = vpop.f32.mrb[0].mxu0
    %917 = vmatprep.mubr.f32.mxu0 0.0
    %918 = vmatmul.mubr.f32.gmra.mrb[0].mxu0 %v768
    %v919 = vpop.f32.mrb[0].mxu0
    %v920 = vadd.f32 0.0, %v919
    %v921 = vpop.f32.mrb[0].mxu0
    %922 = vmatprep.mubr.f32.mxu0 0.0
    %923 = vmatmul.mubr.f32.gmra.mrb[0].mxu0 %v770
    %v924 = vpop.f32.mrb[0].mxu0
    %v925 = vadd.f32 0.0, %v924
    %v926 = vpop.f32.mrb[0].mxu0
    %927 = vmatprep.mubr.f32.mxu0 0.0
    %928 = vmatmul.mubr.f32.gmra.mrb[0].mxu0 %v772
    %v929 = vpop.f32.mrb[0].mxu0
    %v930 = vadd.f32 0.0, %v929
    %v931 = vpop.f32.mrb[0].mxu0
    %932 = vmatprep.mubr.f32.mxu0 0.0
    %933 = vmatmul.mubr.f32.gmra.mrb[0].mxu0 %v774
    %v934 = vpop.f32.mrb[0].mxu0
    %v935 = vadd.f32 0.0, %v934
    %v936 = vpop.f32.mrb[0].mxu0
    %937 = vmatprep.mubr.f32.mxu0 0.0
    %938 = vmatmul.mubr.f32.gmra.mrb[0].mxu0 %v776
    %v939 = vpop.f32.mrb[0].mxu0
    %v940 = vadd.f32 0.0, %v939
    %v941 = vpop.f32.mrb[0].mxu0
    %942 = vmatprep.mubr.f32.mxu0 0.0
    %943 = vmatmul.mubr.f32.gmra.mrb[0].mxu0 %v778
    %v944 = vpop.f32.mrb[0].mxu0
    %v945 = vadd.f32 0.0, %v944
    %v946 = vpop.f32.mrb[0].mxu0
    %947 = vmatprep.mubr.f32.mxu0 0.0
    %948 = vmatmul.mubr.f32.gmra.mrb[0].mxu0 %v780
    %v949 = vpop.f32.mrb[0].mxu0
    %v950 = vadd.f32 0.0, %v949
    %v951 = vpop.f32.mrb[0].mxu0
    %952 = vmatprep.mubr.f32.mxu0 0.0
    %953 = vmatmul.mubr.f32.gmra.mrb[0].mxu0 %v782
    %v954 = vpop.f32.mrb[0].mxu0
    %v955 = vadd.f32 0.0, %v954
    %v956 = vpop.f32.mrb[0].mxu0
    %957 = vmatprep.mubr.f32.mxu0 0.0
    %958 = vmatmul.mubr.f32.gmra.mrb[0].mxu0 %v784
    %v959 = vpop.f32.mrb[0].mxu0
    %v960 = vadd.f32 0.0, %v959
    %v961 = vpop.f32.mrb[0].mxu0
    %962 = vmatprep.mubr.f32.mxu0 0.0
    %963 = vmatmul.mubr.f32.gmra.mrb[0].mxu0 %v786
    %v964 = vpop.f32.mrb[0].mxu0
    %v965 = vadd.f32 0.0, %v964
    %v966 = vpop.f32.mrb[0].mxu0
    %967 = vmatprep.mubr.f32.mxu0 0.0
    %968 = vmatmul.mubr.f32.gmra.mrb[0].mxu0 %v788
    %v969 = vpop.f32.mrb[0].mxu0
    %v970 = vadd.f32 0.0, %v969
    %v971 = vpop.f32.mrb[0].mxu0
    %972 = vmatprep.mubr.f32.mxu0 0.0
    %973 = vmatmul.mubr.f32.gmra.mrb[0].mxu0 %v790
    %v974 = vpop.f32.mrb[0].mxu0
    %v975 = vadd.f32 0.0, %v974
    %v976 = vpop.f32.mrb[0].mxu0
    %977 = vmatprep.mubr.f32.mxu0 0.0
    %978 = vmatmul.mubr.f32.gmra.mrb[0].mxu0 %v792
    %v979 = vpop.f32.mrb[0].mxu0
    %v980 = vadd.f32 0.0, %v979
    %v981 = vpop.f32.mrb[0].mxu0
    %982 = vmatprep.mubr.f32.mxu0 0.0
    %983 = vmatmul.mubr.f32.gmra.mrb[0].mxu0 %v794
    %v984 = vpop.f32.mrb[0].mxu0
    %v985 = vadd.f32 0.0, %v984
    %v986 = vpop.f32.mrb[0].mxu0
    %987 = vmatprep.mubr.f32.mxu0 0.0
    %988 = vmatmul.mubr.f32.gmra.mrb[0].mxu0 %v796
    %v989 = vpop.f32.mrb[0].mxu0
    %v990 = vadd.f32 0.0, %v989
    %v991 = vpop.f32.mrb[0].mxu0
    %992 = vmatprep.mubr.f32.mxu0 0.0
    %993 = vmatmul.mubr.f32.gmra.mrb[0].mxu0 %v798
    %v994 = vpop.f32.mrb[0].mxu0
    %v995 = vadd.f32 0.0, %v994
    %v996 = vpop.f32.mrb[0].mxu0
    %997 = vmatprep.mubr.f32.mxu0 0.0
    %998 = vmatmul.mubr.f32.gmra.mrb[0].mxu0 %v800
    %v999 = vpop.f32.mrb[0].mxu0
    %v1000 = vadd.f32 0.0, %v999
    %v1001 = vpop.f32.mrb[0].mxu0
    %1002 = vmatprep.mubr.f32.mxu0 0.0
    %1003 = vmatmul.mubr.f32.gmra.mrb[0].mxu0 %v802
    %v1004 = vpop.f32.mrb[0].mxu0
    %v1005 = vadd.f32 0.0, %v1004
    %v1006 = vpop.f32.mrb[0].mxu0
    %1007 = vmatprep.mubr.f32.mxu0 0.0
    %1008 = vmatmul.mubr.f32.gmra.mrb[0].mxu0 %v804
    %v1009 = vpop.f32.mrb[0].mxu0
    %v1010 = vadd.f32 0.0, %v1009
    %v1011 = vpop.f32.mrb[0].mxu0
    %1012 = vmatprep.mubr.f32.mxu0 0.0
    %1013 = vmatmul.mubr.f32.gmra.mrb[0].mxu0 %v806
    %v1014 = vpop.f32.mrb[0].mxu0
    %v1015 = vadd.f32 0.0, %v1014
    %v1016 = vpop.f32.mrb[0].mxu0
    %1017 = vmatprep.mubr.f32.mxu0 0.0
    %1018 = vmatmul.mubr.f32.gmra.mrb[0].mxu0 %v808
    %v1019 = vpop.f32.mrb[0].mxu0
    %v1020 = vadd.f32 0.0, %v1019
    %v1021 = vpop.f32.mrb[0].mxu0
    %1022 = vmatprep.mubr.f32.mxu0 0.0
    %1023 = vmatmul.mubr.f32.gmra.mrb[0].mxu0 %v810
    %v1024 = vpop.f32.mrb[0].mxu0
    %v1025 = vadd.f32 0.0, %v1024
    %v1026 = vpop.f32.mrb[0].mxu0
    %1027 = vmatprep.mubr.f32.mxu0 0.0
    %1028 = vmatmul.mubr.f32.gmra.mrb[0].mxu0 %v812
    %v1029 = vpop.f32.mrb[0].mxu0
    %v1030 = vadd.f32 0.0, %v1029
    %v1031 = vpop.f32.mrb[0].mxu0
    %1032 = vmatprep.mubr.f32.mxu0 0.0
    %1033 = vmatmul.mubr.f32.gmra.mrb[0].mxu0 %v814
    %v1034 = vpop.f32.mrb[0].mxu0
    %v1035 = vadd.f32 0.0, %v1034
    %v1036 = vpop.f32.mrb[0].mxu0
    %1037 = vmatprep.mubr.f32.mxu0 0.0
    %1038 = vmatmul.mubr.f32.gmra.mrb[0].mxu0 %v816
    %v1039 = vpop.f32.mrb[0].mxu0
    %v1040 = vadd.f32 0.0, %v1039
    %v1041 = vpop.f32.mrb[0].mxu0
    %1042 = vmatprep.mubr.f32.mxu0 0.0
    %1043 = vmatmul.mubr.f32.gmra.mrb[0].mxu0 %v818
    %v1044 = vpop.f32.mrb[0].mxu0
    %v1045 = vadd.f32 0.0, %v1044
    %v1046 = vpop.f32.mrb[0].mxu0
    %1047 = vmatprep.mubr.f32.mxu0 0.0
    %1048 = vmatmul.mubr.f32.gmra.mrb[0].mxu0 %v820
    %v1049 = vpop.f32.mrb[0].mxu0
    %v1050 = vadd.f32 0.0, %v1049
    %v1051 = vpop.f32.mrb[0].mxu0
    %1052 = vmatprep.mubr.f32.mxu0 0.0
    %1053 = vmatmul.mubr.f32.gmra.mrb[0].mxu0 %v822
    %v1054 = vpop.f32.mrb[0].mxu0
    %v1055 = vadd.f32 0.0, %v1054
    %v1056 = vpop.f32.mrb[0].mxu0
    %1057 = vmatprep.mubr.f32.mxu0 0.0
    %1058 = vmatmul.mubr.f32.gmra.mrb[0].mxu0 %v824
    %v1059 = vpop.f32.mrb[0].mxu0
    %v1060 = vadd.f32 0.0, %v1059
    %v1061 = vpop.f32.mrb[0].mxu0
    %1062 = vmatprep.mubr.f32.mxu0 0.0
    %1063 = vmatmul.mubr.f32.gmra.mrb[0].mxu0 %v826
    %v1064 = vpop.f32.mrb[0].mxu0
    %v1065 = vadd.f32 0.0, %v1064
    %v1066 = vpop.f32.mrb[0].mxu0
    %1067 = vdwg.mxu0
    %v1068 = vrcp.pop %v910
    %v1069 = vrcp.pop %v915
    %v1070 = vrcp.pop %v920
    %v1071 = vrcp.pop %v925
    %v1072 = vrcp.pop %v930
    %v1073 = vrcp.pop %v935
    %v1074 = vrcp.pop %v940
    %v1075 = vrcp.pop %v945
    %v1076 = vrcp.pop %v950
    %v1077 = vrcp.pop %v955
    %v1078 = vrcp.pop %v960
    %v1079 = vrcp.pop %v965
    %v1080 = vrcp.pop %v970
    %v1081 = vrcp.pop %v975
    %v1082 = vrcp.pop %v980
    %v1083 = vrcp.pop %v985
    %v1084 = vrcp.pop %v990
    %v1085 = vrcp.pop %v995
    %v1086 = vrcp.pop %v1000
    %v1087 = vrcp.pop %v1005
    %v1088 = vrcp.pop %v1010
    %v1089 = vrcp.pop %v1015
    %v1090 = vrcp.pop %v1020
    %v1091 = vrcp.pop %v1025
    %v1092 = vrcp.pop %v1030
    %v1093 = vrcp.pop %v1035
    %v1094 = vrcp.pop %v1040
    %v1095 = vrcp.pop %v1045
    %v1096 = vrcp.pop %v1050
    %v1097 = vrcp.pop %v1055
    %v1098 = vrcp.pop %v1060
    %v1099 = vrcp.pop %v1065
    %v1100 = vmul.f32 %v764, %v1068
    %v1101 = vmul.f32 %v766, %v1069
    %v1102 = vmul.f32 %v768, %v1070
    %v1103 = vmul.f32 %v770, %v1071
    %v1104 = vmul.f32 %v772, %v1072
    %v1105 = vmul.f32 %v774, %v1073
    %v1106 = vmul.f32 %v776, %v1074
    %v1107 = vmul.f32 %v778, %v1075
    %v1108 = vmul.f32 %v780, %v1076
    %v1109 = vmul.f32 %v782, %v1077
    %v1110 = vmul.f32 %v784, %v1078
    %v1111 = vmul.f32 %v786, %v1079
    %v1112 = vmul.f32 %v788, %v1080
    %v1113 = vmul.f32 %v790, %v1081
    %v1114 = vmul.f32 %v792, %v1082
    %v1115 = vmul.f32 %v794, %v1083
    %v1116 = vmul.f32 %v796, %v1084
    %v1117 = vmul.f32 %v798, %v1085
    %v1118 = vmul.f32 %v800, %v1086
    %v1119 = vmul.f32 %v802, %v1087
    %v1120 = vmul.f32 %v804, %v1088
    %v1121 = vmul.f32 %v806, %v1089
    %v1122 = vmul.f32 %v808, %v1090
    %v1123 = vmul.f32 %v810, %v1091
    %v1124 = vmul.f32 %v812, %v1092
    %v1125 = vmul.f32 %v814, %v1093
    %v1126 = vmul.f32 %v816, %v1094
    %v1127 = vmul.f32 %v818, %v1095
    %v1128 = vmul.f32 %v820, %v1096
    %v1129 = vmul.f32 %v822, %v1097
    %v1130 = vmul.f32 %v824, %v1098
    %v1131 = vmul.f32 %v826, %v1099
    %v1132 = vld [vmem:[#allocation7] sm:$0xff]
    %v1133 = vld [vmem:[#allocation7 + $0x8] sm:$0xff]
    %v1134 = vld [vmem:[#allocation7 + $0x10] sm:$0xff]
    %v1135 = vld [vmem:[#allocation7 + $0x18] sm:$0xff]
    %v1136 = vld [vmem:[#allocation7 + $0x20] sm:$0xff]
    %v1137 = vld [vmem:[#allocation7 + $0x28] sm:$0xff]
    %v1138 = vld [vmem:[#allocation7 + $0x30] sm:$0xff]
    %v1139 = vld [vmem:[#allocation7 + $0x38] sm:$0xff]
    %v1140 = vld [vmem:[#allocation7 + $0x40] sm:$0xff]
    %v1141 = vld [vmem:[#allocation7 + $0x48] sm:$0xff]
    %v1142 = vld [vmem:[#allocation7 + $0x50] sm:$0xff]
    %v1143 = vld [vmem:[#allocation7 + $0x58] sm:$0xff]
    %v1144 = vld [vmem:[#allocation7 + $0x60] sm:$0xff]
    %v1145 = vld [vmem:[#allocation7 + $0x68] sm:$0xff]
    %v1146 = vld [vmem:[#allocation7 + $0x70] sm:$0xff]
    %v1147 = vld [vmem:[#allocation7 + $0x78] sm:$0xff]
    %v1148 = vld [vmem:[#allocation7 + $0x80] sm:$0xff]
    %v1149 = vld [vmem:[#allocation7 + $0x88] sm:$0xff]
    %v1150 = vld [vmem:[#allocation7 + $0x90] sm:$0xff]
    %v1151 = vld [vmem:[#allocation7 + $0x98] sm:$0xff]
    %v1152 = vld [vmem:[#allocation7 + $0xa0] sm:$0xff]
    %v1153 = vld [vmem:[#allocation7 + $0xa8] sm:$0xff]
    %v1154 = vld [vmem:[#allocation7 + $0xb0] sm:$0xff]
    %v1155 = vld [vmem:[#allocation7 + $0xb8] sm:$0xff]
    %v1156 = vld [vmem:[#allocation7 + $0xc0] sm:$0xff]
    %v1157 = vld [vmem:[#allocation7 + $0xc8] sm:$0xff]
    %v1158 = vld [vmem:[#allocation7 + $0xd0] sm:$0xff]
    %v1159 = vld [vmem:[#allocation7 + $0xd8] sm:$0xff]
    %v1160 = vld [vmem:[#allocation7 + $0xe0] sm:$0xff]
    %v1161 = vld [vmem:[#allocation7 + $0xe8] sm:$0xff]
    %v1162 = vld [vmem:[#allocation7 + $0xf0] sm:$0xff]
    %v1163 = vld [vmem:[#allocation7 + $0xf8] sm:$0xff]
    %v1164 = vld [vmem:[#allocation8 + $0x10] sm:$0xff]
    %v1165 = vld [vmem:[#allocation8 + $0x28] sm:$0xff]
    %v1166 = vld [vmem:[#allocation8 + $0x40] sm:$0xff]
    %v1167 = vld [vmem:[#allocation8 + $0x58] sm:$0xff]
    %v1168 = vld [vmem:[#allocation8 + $0x70] sm:$0xff]
    %v1169 = vld [vmem:[#allocation8 + $0x88] sm:$0xff]
    %v1170 = vld [vmem:[#allocation8 + $0xa0] sm:$0xff]
    %v1171 = vld [vmem:[#allocation8 + $0xb8] sm:$0xff]
    %v1172 = vld [vmem:[#allocation8 + $0xd0] sm:$0xff]
    %v1173 = vld [vmem:[#allocation8 + $0xe8] sm:$0xff]
    %v1174 = vld [vmem:[#allocation8 + $0x100] sm:$0xff]
    %v1175 = vld [vmem:[#allocation8 + $0x118] sm:$0xff]
    %v1176 = vld [vmem:[#allocation8 + $0x130] sm:$0xff]
    %v1177 = vld [vmem:[#allocation8 + $0x148] sm:$0xff]
    %v1178 = vld [vmem:[#allocation8 + $0x160] sm:$0xff]
    %v1179 = vld [vmem:[#allocation8 + $0x178] sm:$0xff]
    %1180 = vmatprep.subr.mxu0 0.0
    %1181 = vmatpush1.msra.mxu0 %v1164
    %1182 = vmatprep.subr.mxu0 0.0
    %1183 = vmatpush1.msra.mxu0 %v1165
    %1184 = vmatprep.subr.mxu0 0.0
    %1185 = vmatpush1.msra.mxu0 %v1166
    %1186 = vmatprep.subr.mxu0 0.0
    %1187 = vmatpush1.msra.mxu0 %v1167
    %1188 = vmatprep.subr.mxu0 0.0
    %1189 = vmatpush1.msra.mxu0 %v1168
    %1190 = vmatprep.subr.mxu0 0.0
    %1191 = vmatpush1.msra.mxu0 %v1169
    %1192 = vmatprep.subr.mxu0 0.0
    %1193 = vmatpush1.msra.mxu0 %v1170
    %1194 = vmatprep.subr.mxu0 0.0
    %1195 = vmatpush1.msra.mxu0 %v1171
    %1196 = vmatprep.subr.mxu0 0.0
    %1197 = vmatpush1.msra.mxu0 %v1172
    %1198 = vmatprep.subr.mxu0 0.0
    %1199 = vmatpush1.msra.mxu0 %v1173
    %1200 = vmatprep.subr.mxu0 0.0
    %1201 = vmatpush1.msra.mxu0 %v1174
    %1202 = vmatprep.subr.mxu0 0.0
    %1203 = vmatpush1.msra.mxu0 %v1175
    %1204 = vmatprep.subr.mxu0 0.0
    %1205 = vmatpush1.msra.mxu0 %v1176
    %1206 = vmatprep.subr.mxu0 0.0
    %1207 = vmatpush1.msra.mxu0 %v1177
    %1208 = vmatprep.subr.mxu0 0.0
    %1209 = vmatpush1.msra.mxu0 %v1178
    %1210 = vmatprep.subr.mxu0 0.0
    %1211 = vmatpush1.msra.mxu0 %v1179
    %1212 = vmatprep.subr.mxu0 0.0
    %1213 = vmatpush1.msra.mxu0 0.0
    %1214 = vmatprep.subr.mxu0 0.0
    %1215 = vmatpush1.msra.mxu0 0.0
    %1216 = vmatprep.subr.mxu0 0.0
    %1217 = vmatpush1.msra.mxu0 0.0
    %1218 = vmatprep.subr.mxu0 0.0
    %1219 = vmatpush1.msra.mxu0 0.0
    %1220 = vmatprep.subr.mxu0 0.0
    %1221 = vmatpush1.msra.mxu0 0.0
    %1222 = vmatprep.subr.mxu0 0.0
    %1223 = vmatpush1.msra.mxu0 0.0
    %1224 = vmatprep.subr.mxu0 0.0
    %1225 = vmatpush1.msra.mxu0 0.0
    %1226 = vmatprep.subr.mxu0 0.0
    %1227 = vmatpush1.msra.mxu0 0.0
    %1228 = vmatprep.subr.mxu0 0.0
    %1229 = vmatpush1.msra.mxu0 0.0
    %1230 = vmatprep.subr.mxu0 0.0
    %1231 = vmatpush1.msra.mxu0 0.0
    %1232 = vmatprep.subr.mxu0 0.0
    %1233 = vmatpush1.msra.mxu0 0.0
    %1234 = vmatprep.subr.mxu0 0.0
    %1235 = vmatpush1.msra.mxu0 0.0
    %1236 = vmatprep.subr.mxu0 0.0
    %1237 = vmatpush1.msra.mxu0 0.0
    %1238 = vmatprep.subr.mxu0 0.0
    %1239 = vmatpush1.msra.mxu0 0.0
    %1240 = vmatprep.subr.mxu0 0.0
    %1241 = vmatpush1.msra.mxu0 0.0
    %1242 = vmatprep.subr.mxu0 0.0
    %1243 = vmatpush1.msra.mxu0 0.0
    %1244 = vmatprep.mubr.f32.mxu0 0.0
    %1245 = vmatmul.mubr.f32.gmra.mrb[0].mxu0 %v1132
    %v1246 = vpop.f32.mrb[0].mxu0
    %v1247 = vadd.f32 0.0, %v1246
    %v1248 = vpop.f32.mrb[0].mxu0
    %1249 = vmatprep.mubr.f32.mxu0 0.0
    %1250 = vmatmul.mubr.f32.gmra.mrb[0].mxu0 %v1133
    %v1251 = vpop.f32.mrb[0].mxu0
    %v1252 = vadd.f32 0.0, %v1251
    %v1253 = vpop.f32.mrb[0].mxu0
    %1254 = vmatprep.mubr.f32.mxu0 0.0
    %1255 = vmatmul.mubr.f32.gmra.mrb[0].mxu0 %v1134
    %v1256 = vpop.f32.mrb[0].mxu0
    %v1257 = vadd.f32 0.0, %v1256
    %v1258 = vpop.f32.mrb[0].mxu0
    %1259 = vmatprep.mubr.f32.mxu0 0.0
    %1260 = vmatmul.mubr.f32.gmra.mrb[0].mxu0 %v1135
    %v1261 = vpop.f32.mrb[0].mxu0
    %v1262 = vadd.f32 0.0, %v1261
    %v1263 = vpop.f32.mrb[0].mxu0
    %1264 = vmatprep.mubr.f32.mxu0 0.0
    %1265 = vmatmul.mubr.f32.gmra.mrb[0].mxu0 %v1136
    %v1266 = vpop.f32.mrb[0].mxu0
    %v1267 = vadd.f32 0.0, %v1266
    %v1268 = vpop.f32.mrb[0].mxu0
    %1269 = vmatprep.mubr.f32.mxu0 0.0
    %1270 = vmatmul.mubr.f32.gmra.mrb[0].mxu0 %v1137
    %v1271 = vpop.f32.mrb[0].mxu0
    %v1272 = vadd.f32 0.0, %v1271
    %v1273 = vpop.f32.mrb[0].mxu0
    %1274 = vmatprep.mubr.f32.mxu0 0.0
    %1275 = vmatmul.mubr.f32.gmra.mrb[0].mxu0 %v1138
    %v1276 = vpop.f32.mrb[0].mxu0
    %v1277 = vadd.f32 0.0, %v1276
    %v1278 = vpop.f32.mrb[0].mxu0
    %1279 = vmatprep.mubr.f32.mxu0 0.0
    %1280 = vmatmul.mubr.f32.gmra.mrb[0].mxu0 %v1139
    %v1281 = vpop.f32.mrb[0].mxu0
    %v1282 = vadd.f32 0.0, %v1281
    %v1283 = vpop.f32.mrb[0].mxu0
    %1284 = vmatprep.mubr.f32.mxu0 0.0
    %1285 = vmatmul.mubr.f32.gmra.mrb[0].mxu0 %v1140
    %v1286 = vpop.f32.mrb[0].mxu0
    %v1287 = vadd.f32 0.0, %v1286
    %v1288 = vpop.f32.mrb[0].mxu0
    %1289 = vmatprep.mubr.f32.mxu0 0.0
    %1290 = vmatmul.mubr.f32.gmra.mrb[0].mxu0 %v1141
    %v1291 = vpop.f32.mrb[0].mxu0
    %v1292 = vadd.f32 0.0, %v1291
    %v1293 = vpop.f32.mrb[0].mxu0
    %1294 = vmatprep.mubr.f32.mxu0 0.0
    %1295 = vmatmul.mubr.f32.gmra.mrb[0].mxu0 %v1142
    %v1296 = vpop.f32.mrb[0].mxu0
    %v1297 = vadd.f32 0.0, %v1296
    %v1298 = vpop.f32.mrb[0].mxu0
    %1299 = vmatprep.mubr.f32.mxu0 0.0
    %1300 = vmatmul.mubr.f32.gmra.mrb[0].mxu0 %v1143
    %v1301 = vpop.f32.mrb[0].mxu0
    %v1302 = vadd.f32 0.0, %v1301
    %v1303 = vpop.f32.mrb[0].mxu0
    %1304 = vmatprep.mubr.f32.mxu0 0.0
    %1305 = vmatmul.mubr.f32.gmra.mrb[0].mxu0 %v1144
    %v1306 = vpop.f32.mrb[0].mxu0
    %v1307 = vadd.f32 0.0, %v1306
    %v1308 = vpop.f32.mrb[0].mxu0
    %1309 = vmatprep.mubr.f32.mxu0 0.0
    %1310 = vmatmul.mubr.f32.gmra.mrb[0].mxu0 %v1145
    %v1311 = vpop.f32.mrb[0].mxu0
    %v1312 = vadd.f32 0.0, %v1311
    %v1313 = vpop.f32.mrb[0].mxu0
    %1314 = vmatprep.mubr.f32.mxu0 0.0
    %1315 = vmatmul.mubr.f32.gmra.mrb[0].mxu0 %v1146
    %v1316 = vpop.f32.mrb[0].mxu0
    %v1317 = vadd.f32 0.0, %v1316
    %v1318 = vpop.f32.mrb[0].mxu0
    %1319 = vmatprep.mubr.f32.mxu0 0.0
    %1320 = vmatmul.mubr.f32.gmra.mrb[0].mxu0 %v1147
    %v1321 = vpop.f32.mrb[0].mxu0
    %v1322 = vadd.f32 0.0, %v1321
    %v1323 = vpop.f32.mrb[0].mxu0
    %1324 = vmatprep.mubr.f32.mxu0 0.0
    %1325 = vmatmul.mubr.f32.gmra.mrb[0].mxu0 %v1148
    %v1326 = vpop.f32.mrb[0].mxu0
    %v1327 = vadd.f32 0.0, %v1326
    %v1328 = vpop.f32.mrb[0].mxu0
    %1329 = vmatprep.mubr.f32.mxu0 0.0
    %1330 = vmatmul.mubr.f32.gmra.mrb[0].mxu0 %v1149
    %v1331 = vpop.f32.mrb[0].mxu0
    %v1332 = vadd.f32 0.0, %v1331
    %v1333 = vpop.f32.mrb[0].mxu0
    %1334 = vmatprep.mubr.f32.mxu0 0.0
    %1335 = vmatmul.mubr.f32.gmra.mrb[0].mxu0 %v1150
    %v1336 = vpop.f32.mrb[0].mxu0
    %v1337 = vadd.f32 0.0, %v1336
    %v1338 = vpop.f32.mrb[0].mxu0
    %1339 = vmatprep.mubr.f32.mxu0 0.0
    %1340 = vmatmul.mubr.f32.gmra.mrb[0].mxu0 %v1151
    %v1341 = vpop.f32.mrb[0].mxu0
    %v1342 = vadd.f32 0.0, %v1341
    %v1343 = vpop.f32.mrb[0].mxu0
    %1344 = vmatprep.mubr.f32.mxu0 0.0
    %1345 = vmatmul.mubr.f32.gmra.mrb[0].mxu0 %v1152
    %v1346 = vpop.f32.mrb[0].mxu0
    %v1347 = vadd.f32 0.0, %v1346
    %v1348 = vpop.f32.mrb[0].mxu0
    %1349 = vmatprep.mubr.f32.mxu0 0.0
    %1350 = vmatmul.mubr.f32.gmra.mrb[0].mxu0 %v1153
    %v1351 = vpop.f32.mrb[0].mxu0
    %v1352 = vadd.f32 0.0, %v1351
    %v1353 = vpop.f32.mrb[0].mxu0
    %1354 = vmatprep.mubr.f32.mxu0 0.0
    %1355 = vmatmul.mubr.f32.gmra.mrb[0].mxu0 %v1154
    %v1356 = vpop.f32.mrb[0].mxu0
    %v1357 = vadd.f32 0.0, %v1356
    %v1358 = vpop.f32.mrb[0].mxu0
    %1359 = vmatprep.mubr.f32.mxu0 0.0
    %1360 = vmatmul.mubr.f32.gmra.mrb[0].mxu0 %v1155
    %v1361 = vpop.f32.mrb[0].mxu0
    %v1362 = vadd.f32 0.0, %v1361
    %v1363 = vpop.f32.mrb[0].mxu0
    %1364 = vmatprep.mubr.f32.mxu0 0.0
    %1365 = vmatmul.mubr.f32.gmra.mrb[0].mxu0 %v1156
    %v1366 = vpop.f32.mrb[0].mxu0
    %v1367 = vadd.f32 0.0, %v1366
    %v1368 = vpop.f32.mrb[0].mxu0
    %1369 = vmatprep.mubr.f32.mxu0 0.0
    %1370 = vmatmul.mubr.f32.gmra.mrb[0].mxu0 %v1157
    %v1371 = vpop.f32.mrb[0].mxu0
    %v1372 = vadd.f32 0.0, %v1371
    %v1373 = vpop.f32.mrb[0].mxu0
    %1374 = vmatprep.mubr.f32.mxu0 0.0
    %1375 = vmatmul.mubr.f32.gmra.mrb[0].mxu0 %v1158
    %v1376 = vpop.f32.mrb[0].mxu0
    %v1377 = vadd.f32 0.0, %v1376
    %v1378 = vpop.f32.mrb[0].mxu0
    %1379 = vmatprep.mubr.f32.mxu0 0.0
    %1380 = vmatmul.mubr.f32.gmra.mrb[0].mxu0 %v1159
    %v1381 = vpop.f32.mrb[0].mxu0
    %v1382 = vadd.f32 0.0, %v1381
    %v1383 = vpop.f32.mrb[0].mxu0
    %1384 = vmatprep.mubr.f32.mxu0 0.0
    %1385 = vmatmul.mubr.f32.gmra.mrb[0].mxu0 %v1160
    %v1386 = vpop.f32.mrb[0].mxu0
    %v1387 = vadd.f32 0.0, %v1386
    %v1388 = vpop.f32.mrb[0].mxu0
    %1389 = vmatprep.mubr.f32.mxu0 0.0
    %1390 = vmatmul.mubr.f32.gmra.mrb[0].mxu0 %v1161
    %v1391 = vpop.f32.mrb[0].mxu0
    %v1392 = vadd.f32 0.0, %v1391
    %v1393 = vpop.f32.mrb[0].mxu0
    %1394 = vmatprep.mubr.f32.mxu0 0.0
    %1395 = vmatmul.mubr.f32.gmra.mrb[0].mxu0 %v1162
    %v1396 = vpop.f32.mrb[0].mxu0
    %v1397 = vadd.f32 0.0, %v1396
    %v1398 = vpop.f32.mrb[0].mxu0
    %1399 = vmatprep.mubr.f32.mxu0 0.0
    %1400 = vmatmul.mubr.f32.gmra.mrb[0].mxu0 %v1163
    %v1401 = vpop.f32.mrb[0].mxu0
    %v1402 = vadd.f32 0.0, %v1401
    %v1403 = vpop.f32.mrb[0].mxu0
    %1404 = vdwg.mxu0
    %v1405 = vmul.f32 %v1100, %v1247
    %v1406 = vmul.f32 %v1101, %v1252
    %v1407 = vmul.f32 %v1102, %v1257
    %v1408 = vmul.f32 %v1103, %v1262
    %v1409 = vmul.f32 %v1104, %v1267
    %v1410 = vmul.f32 %v1105, %v1272
    %v1411 = vmul.f32 %v1106, %v1277
    %v1412 = vmul.f32 %v1107, %v1282
    %v1413 = vmul.f32 %v1108, %v1287
    %v1414 = vmul.f32 %v1109, %v1292
    %v1415 = vmul.f32 %v1110, %v1297
    %v1416 = vmul.f32 %v1111, %v1302
    %v1417 = vmul.f32 %v1112, %v1307
    %v1418 = vmul.f32 %v1113, %v1312
    %v1419 = vmul.f32 %v1114, %v1317
    %v1420 = vmul.f32 %v1115, %v1322
    %v1421 = vmul.f32 %v1116, %v1327
    %v1422 = vmul.f32 %v1117, %v1332
    %v1423 = vmul.f32 %v1118, %v1337
    %v1424 = vmul.f32 %v1119, %v1342
    %v1425 = vmul.f32 %v1120, %v1347
    %v1426 = vmul.f32 %v1121, %v1352
    %v1427 = vmul.f32 %v1122, %v1357
    %v1428 = vmul.f32 %v1123, %v1362
    %v1429 = vmul.f32 %v1124, %v1367
    %v1430 = vmul.f32 %v1125, %v1372
    %v1431 = vmul.f32 %v1126, %v1377
    %v1432 = vmul.f32 %v1127, %v1382
    %v1433 = vmul.f32 %v1128, %v1387
    %v1434 = vmul.f32 %v1129, %v1392
    %v1435 = vmul.f32 %v1130, %v1397
    %v1436 = vmul.f32 %v1131, %v1402
    %1437 = vst [vmem:[#allocation11] sm:$0xff] %v1405
    %1438 = vst [vmem:[#allocation11 + $0x8] sm:$0xff] %v1406
    %1439 = vst [vmem:[#allocation11 + $0x10] sm:$0xff] %v1407
    %1440 = vst [vmem:[#allocation11 + $0x18] sm:$0xff] %v1408
    %1441 = vst [vmem:[#allocation11 + $0x20] sm:$0xff] %v1409
    %1442 = vst [vmem:[#allocation11 + $0x28] sm:$0xff] %v1410
    %1443 = vst [vmem:[#allocation11 + $0x30] sm:$0xff] %v1411
    %1444 = vst [vmem:[#allocation11 + $0x38] sm:$0xff] %v1412
    %1445 = vst [vmem:[#allocation11 + $0x40] sm:$0xff] %v1413
    %1446 = vst [vmem:[#allocation11 + $0x48] sm:$0xff] %v1414
    %1447 = vst [vmem:[#allocation11 + $0x50] sm:$0xff] %v1415
    %1448 = vst [vmem:[#allocation11 + $0x58] sm:$0xff] %v1416
    %1449 = vst [vmem:[#allocation11 + $0x60] sm:$0xff] %v1417
    %1450 = vst [vmem:[#allocation11 + $0x68] sm:$0xff] %v1418
    %1451 = vst [vmem:[#allocation11 + $0x70] sm:$0xff] %v1419
    %1452 = vst [vmem:[#allocation11 + $0x78] sm:$0xff] %v1420
    %1453 = vst [vmem:[#allocation11 + $0x80] sm:$0xff] %v1421
    %1454 = vst [vmem:[#allocation11 + $0x88] sm:$0xff] %v1422
    %1455 = vst [vmem:[#allocation11 + $0x90] sm:$0xff] %v1423
    %1456 = vst [vmem:[#allocation11 + $0x98] sm:$0xff] %v1424
    %1457 = vst [vmem:[#allocation11 + $0xa0] sm:$0xff] %v1425
    %1458 = vst [vmem:[#allocation11 + $0xa8] sm:$0xff] %v1426
    %1459 = vst [vmem:[#allocation11 + $0xb0] sm:$0xff] %v1427
    %1460 = vst [vmem:[#allocation11 + $0xb8] sm:$0xff] %v1428
    %1461 = vst [vmem:[#allocation11 + $0xc0] sm:$0xff] %v1429
    %1462 = vst [vmem:[#allocation11 + $0xc8] sm:$0xff] %v1430
    %1463 = vst [vmem:[#allocation11 + $0xd0] sm:$0xff] %v1431
    %1464 = vst [vmem:[#allocation11 + $0xd8] sm:$0xff] %v1432
    %1465 = vst [vmem:[#allocation11 + $0xe0] sm:$0xff] %v1433
    %1466 = vst [vmem:[#allocation11 + $0xe8] sm:$0xff] %v1434
    %1467 = vst [vmem:[#allocation11 + $0xf0] sm:$0xff] %v1435
    %1468 = vst [vmem:[#allocation11 + $0xf8] sm:$0xff] %v1436
    // Predicated region
    $region42: #{tpu_custom_call.1} parent=1 // pred_check
      _
    $region43: #{tpu_custom_call.1} parent=1 // pred_check_branch
      %1470 = sbr.rel (0) target = $region45
    $region44: #{tpu_custom_call.1} parent=1 // pred_region
      %s1472 = ssub.s32 4096, 4096
      %1473 = vsyncadd [#allocation4], %s1472
      %s1474 = sshll.u32 [#allocation11], 4
      %s1475 = int_to_ptr.vmem [resolvable:$true] %s1474
      %1480 = dma.vmem_to_hbm [thread:$0]  %s1475, 4096, %s5, [#allocation4], 128, 128, 8
    $region45: #{tpu_custom_call.1} parent=1 // pred_fallthru
      _
    // Predicated region
    $region46: #{tpu_custom_call.1} parent=1 // pred_check
      _
    $region47: #{tpu_custom_call.1} parent=1 // pred_check_branch
      %1482 = sbr.rel (0) target = $region49
    $region48: #{tpu_custom_call.1} parent=1 // pred_region
      %1483 = dma.done [#allocation4], 4096
    $region49: #{tpu_custom_call.1} parent=1 // pred_fallthru
      _
    %1484 = vsyncpa [#allocation3], 1
    %1485 = vsyncpa [#allocation6], 1
    %1486 = vsyncpa [#allocation9], 1
    %1487 = vsyncpa [#allocation4], 1

</llo_original>
